<compile_context>
chip_gen: v7x
topology: tpu7x:2x2x1
jax: 0.10.0
libtpu: 0.0.40
codegen_flags: <defaults>
</compile_context>

<pallas_src>
import jax
import jax.numpy as jnp
from jax.experimental import pallas as pl
from jax.experimental.pallas import tpu as pltpu


def _round_up(n, m):
    return ((n + m - 1) // m) * m


def _pad2(a, shape):
    return jnp.pad(a, [(0, t - s) for s, t in zip(a.shape, shape)])


def outer_pnn_kernel(cat_ref,
                     w1_ref, b1_ref,
                     w2_ref, b2_ref,
                     w3_ref, b3_ref,
                     w4_ref, b4_ref,
                     out_ref):
    # Matmul operands in the compute dtype (bf16 by default); accumulation and
    # all elementwise work (bias add, ReLU, sigmoid) in f32 (v5e VPU/EUP have
    # no bf16 path).
    cdt = cat_ref.dtype

    # Layer 1: single MXU pass over the pre-concatenated [flat_emb, s*s] input.
    h = jnp.dot(cat_ref[...], w1_ref[...],
                preferred_element_type=jnp.float32) + b1_ref[...]
    h = jnp.maximum(h, 0.0)
    # Dropout(p=0.2): identity at inference.

    h = jnp.dot(h.astype(cdt), w2_ref[...],
                preferred_element_type=jnp.float32) + b2_ref[...]
    h = jnp.maximum(h, 0.0)

    h = jnp.dot(h.astype(cdt), w3_ref[...],
                preferred_element_type=jnp.float32) + b3_ref[...]
    h = jnp.maximum(h, 0.0)

    logit = jnp.dot(h.astype(cdt), w4_ref[...],
                    preferred_element_type=jnp.float32) + b4_ref[...]
    out_ref[...] = jax.nn.sigmoid(logit)                     # (TB, 8)


def init_params(key, feature_nums, field_nums, latent_dims):
    """Deterministic parameter init matching the PyTorch module's __init__."""
    deep_in = latent_dims + field_nums * latent_dims
    dims = [deep_in, 300, 300, 300, 1]
    keys = jax.random.split(key, 5)

    # nn.Embedding + xavier_uniform_
    bound_e = (6.0 / (feature_nums + latent_dims)) ** 0.5
    emb_table = jax.random.uniform(keys[0], (feature_nums, latent_dims),
                                   jnp.float32, -bound_e, bound_e)
    # self.kernel = ones((L, L))
    kern = jnp.ones((latent_dims, latent_dims), jnp.float32)

    params = [emb_table, kern]
    # Linear layers: weight ~ U(-1/sqrt(in), 1/sqrt(in)), bias = 0.
    for i in range(4):
        fan_in = dims[i]
        y = 1.0 / (fan_in ** 0.5)
        w = jax.random.uniform(keys[i + 1], (dims[i], dims[i + 1]),
                               jnp.float32, -y, y)            # stored as (in, out)
        b = jnp.zeros((1, dims[i + 1]), jnp.float32)
        params += [w, b]
    return params


def outer_pnn_forward(x, params, compute_dtype=jnp.bfloat16, batch_tile=1024):
    """x: int32 indices of shape (batch, field_nums)."""
    emb_table, kern, w1, b1, w2, b2, w3, b3, w4, b4 = params
    B, F = x.shape
    L = emb_table.shape[1]
    H = w1.shape[1]
    FL = F * L
    K = FL + L                                                # layer-1 fan-in

    # ---- XLA glue: embedding gather + field-sum + concat (layout plumbing) ----
    # TODO(synk): pull the nn.Embedding gather + field-sum in-kernel
    # (scalar-prefetched indices, VMEM-resident or DMA-gathered table) so emb3
    # is never materialized in HBM; deferred because the dynamic-gather
    # lowering depends on table size and XLA fuses this gather acceptably.
    emb3 = jnp.take(emb_table, x, axis=0)                     # (B, F, L)
    s = jnp.sum(emb3, axis=1)                                 # (B, L)  sum_embedding_x
    flat = emb3.reshape(B, FL)                                # (B, F*L)
    # cross[b, j] = s[b, j]^2 * sum_i kernel[i, j], folded into W1's cross half:
    #   [flat, s*s] @ [W1a ; ksum[:, None]*W1b] == [flat, cross] @ W1
    cat = jnp.concatenate([flat, s * s], axis=1)              # (B, FL + L)
    ksum = jnp.sum(kern, axis=0)                              # (L,)
    w1cat = jnp.concatenate([w1[:FL, :], ksum[:, None] * w1[FL:, :]], axis=0)

    # Lane-align hidden width (300 -> 384, 3x128) so MXU tiles are unmasked;
    # the scalar output is padded only to 8 (full-dim block, tiny writeback).
    H_pad = _round_up(H, 128)
    OUT_PAD = 8
    w1_p = _pad2(w1cat, (K, H_pad)).astype(compute_dtype)
    b1_p = _pad2(b1, (1, H_pad))
    w2_p = _pad2(w2, (H_pad, H_pad)).astype(compute_dtype)
    b2_p = _pad2(b2, (1, H_pad))
    w3_p = _pad2(w3, (H_pad, H_pad)).astype(compute_dtype)
    b3_p = _pad2(b3, (1, H_pad))
    w4_p = _pad2(w4, (H_pad, OUT_PAD)).astype(compute_dtype)
    b4_p = _pad2(b4, (1, OUT_PAD))

    # Batch tiling: large tiles amortize the ~0.35 us per-grid-step overhead;
    # for big batches keep TB a multiple of 256 and give the grid >= 2 steps
    # so ("parallel",) can feed both v7x TensorCores. Tiny batches fall back
    # to a single 8-row-aligned tile.
    if B >= 2 * 256:
        TB = min(batch_tile, _round_up(pl.cdiv(B, 2), 256))
    else:
        TB = _round_up(B, 8)
    TB = max(TB, 8)
    B_pad = _round_up(B, TB)
    cat_p = _pad2(cat, (B_pad, K)).astype(compute_dtype)

    # VMEM budget: double-buffered streamed blocks + resident weights + f32
    # intermediates, with 2x headroom; floor 32 MiB (>= default scoped limit
    # on every chip), cap 48 MiB (inside v7x's 64 MiB physical VMEM).
    est = 2 * (2 * TB * 128 * 2          # cat tile (bf16, lane-padded) x2 buffers
               + 2 * TB * 128 * 4        # out tile (f32, lane-padded)  x2 buffers
               + 2 * 1024 * 1024         # resident weights/biases (double-buffered)
               + 16 * TB * H_pad)        # in-kernel f32/bf16 intermediates
    vmem_limit = int(min(48 * 1024 * 1024, max(32 * 1024 * 1024, est)))

    def row_spec(shape):        # streamed per batch tile
        return pl.BlockSpec(shape, lambda i: (i, 0))

    def res_spec(shape):        # VMEM-resident across all grid steps
        return pl.BlockSpec(shape, lambda i: (0, 0))

    out = pl.pallas_call(
        outer_pnn_kernel,
        out_shape=jax.ShapeDtypeStruct((B_pad, OUT_PAD), jnp.float32),
        grid=(B_pad // TB,),
        in_specs=[
            row_spec((TB, K)),             # [flat_emb, s*s] (streamed)
            res_spec((K, H_pad)),          # W1cat = [W1a ; colsum(kernel)*W1b]
            res_spec((1, H_pad)),          # b1
            res_spec((H_pad, H_pad)),      # W2
            res_spec((1, H_pad)),          # b2
            res_spec((H_pad, H_pad)),      # W3
            res_spec((1, H_pad)),          # b3
            res_spec((H_pad, OUT_PAD)),    # W4 (output padded only to 8 lanes)
            res_spec((1, OUT_PAD)),        # b4
        ],
        out_specs=row_spec((TB, OUT_PAD)),
        compiler_params=pltpu.CompilerParams(
            dimension_semantics=("parallel",),   # megacore sharding on v7x
            vmem_limit_bytes=vmem_limit),
    )(cat_p, w1_p, b1_p, w2_p, b2_p, w3_p, b3_p, w4_p, b4_p)

    return out[:B, :1]


def outer_pnn_reference(x, params):
    """Pure-JAX reference mirroring the PyTorch forward literally."""
    emb_table, kern, w1, b1, w2, b2, w3, b3, w4, b4 = params
    B, F = x.shape
    L = emb_table.shape[1]
    emb3 = jnp.take(emb_table, x, axis=0)                     # (B, F, L)
    s = jnp.sum(emb3, axis=1)[:, None, :]                     # (B, 1, L)
    outer = s * kern * s                                      # (B, L, L)
    cross = jnp.sum(outer, axis=1)                            # (B, L)
    cat = jnp.concatenate([emb3.reshape(B, F * L), cross], axis=1)
    h = jnp.maximum(cat @ w1 + b1, 0.0)
    h = jnp.maximum(h @ w2 + b2, 0.0)
    h = jnp.maximum(h @ w3 + b3, 0.0)
    return jax.nn.sigmoid(h @ w4 + b4)


if __name__ == "__main__":
    feature_nums = 32
    field_nums = 4
    latent_dims = 8
    batch = 8

    key = jax.random.PRNGKey(0)
    k_params, k_x, k_x2 = jax.random.split(key, 3)
    params = init_params(k_params, feature_nums, field_nums, latent_dims)
    x = jax.random.randint(k_x, (batch, field_nums), 0, feature_nums,
                           dtype=jnp.int32)

    # Default (bf16 matmuls) path.
    out = jax.block_until_ready(jax.jit(outer_pnn_forward)(x, params))
    assert out.shape == (batch, 1)
    assert bool(jnp.all(jnp.isfinite(out)))
    assert bool(jnp.all((out >= 0.0) & (out <= 1.0)))

    # Correctness checks against the pure-JAX reference (single-tile path).
    ref = outer_pnn_reference(x, params)
    out_f32 = outer_pnn_forward(x, params, compute_dtype=jnp.float32)
    assert bool(jnp.allclose(out_f32, ref, atol=1e-5, rtol=1e-5))
    assert bool(jnp.allclose(out, ref, atol=5e-2))

    # Multi-tile path (exercises batch padding + a >1-step grid).
    x_big = jax.random.randint(k_x2, (600, field_nums), 0, feature_nums,
                               dtype=jnp.int32)
    out_big = jax.block_until_ready(
        outer_pnn_forward(x_big, params, compute_dtype=jnp.float32))
    ref_big = outer_pnn_reference(x_big, params)
    assert out_big.shape == (600, 1)
    assert bool(jnp.allclose(out_big, ref_big, atol=1e-5, rtol=1e-5))

    print("KERNEL_OK")
</pallas_src>

<mosaic_0001>
module attributes {stable_mosaic.version = 11 : i64} {
  func.func @outer_pnn_kernel(%arg0: i32, %arg1: memref<8x40xbf16, #tpu.memory_space<vmem>>, %arg2: memref<40x384xbf16, #tpu.memory_space<vmem>>, %arg3: memref<1x384xf32, #tpu.memory_space<vmem>>, %arg4: memref<384x384xbf16, #tpu.memory_space<vmem>>, %arg5: memref<1x384xf32, #tpu.memory_space<vmem>>, %arg6: memref<384x384xbf16, #tpu.memory_space<vmem>>, %arg7: memref<1x384xf32, #tpu.memory_space<vmem>>, %arg8: memref<384x8xbf16, #tpu.memory_space<vmem>>, %arg9: memref<1x8xf32, #tpu.memory_space<vmem>>, %arg10: memref<8x8xf32, #tpu.memory_space<vmem>>) attributes {dimension_semantics = [#tpu.dimension_semantics<parallel>], iteration_bounds = array<i64: 1>, scalar_prefetch = 0 : i64, scratch_operands = 0 : i64, tpu.core_type = #tpu.core_type<tc>, window_params = [{transform_indices = @transform_0, window_bounds = array<i64: 8, 40>}, {pipeline_mode = #tpu.pipeline_mode<synchronous>, transform_indices = @transform_1, window_bounds = array<i64: 40, 384>}, {pipeline_mode = #tpu.pipeline_mode<synchronous>, transform_indices = @transform_2, window_bounds = array<i64: 1, 384>}, {pipeline_mode = #tpu.pipeline_mode<synchronous>, transform_indices = @transform_3, window_bounds = array<i64: 384, 384>}, {pipeline_mode = #tpu.pipeline_mode<synchronous>, transform_indices = @transform_4, window_bounds = array<i64: 1, 384>}, {pipeline_mode = #tpu.pipeline_mode<synchronous>, transform_indices = @transform_5, window_bounds = array<i64: 384, 384>}, {pipeline_mode = #tpu.pipeline_mode<synchronous>, transform_indices = @transform_6, window_bounds = array<i64: 1, 384>}, {pipeline_mode = #tpu.pipeline_mode<synchronous>, transform_indices = @transform_7, window_bounds = array<i64: 384, 8>}, {pipeline_mode = #tpu.pipeline_mode<synchronous>, transform_indices = @transform_8, window_bounds = array<i64: 1, 8>}, {transform_indices = @transform_9, window_bounds = array<i64: 8, 8>}]} {
    %c0 = arith.constant 0 : index
    %c0_0 = arith.constant 0 : index
    %0 = vector.load %arg1[%c0, %c0_0] : memref<8x40xbf16, #tpu.memory_space<vmem>>, vector<8x40xbf16>
    %c0_1 = arith.constant 0 : index
    %c0_2 = arith.constant 0 : index
    %1 = vector.load %arg2[%c0_1, %c0_2] : memref<40x384xbf16, #tpu.memory_space<vmem>>, vector<40x384xbf16>
    %cst = arith.constant dense<0.000000e+00> : vector<8x384xf32>
    %2 = tpu.matmul %0, %1, %cst {dimension_numbers = #tpu.dot_dimension_numbers<[1], [0], [0], [1], [0, 0, 1, 1], [], []>} : vector<8x40xbf16>, vector<40x384xbf16>, vector<8x384xf32> -> vector<8x384xf32>
    %c0_3 = arith.constant 0 : index
    %c0_4 = arith.constant 0 : index
    %3 = vector.load %arg3[%c0_3, %c0_4] : memref<1x384xf32, #tpu.memory_space<vmem>>, vector<1x384xf32>
    %4 = vector.broadcast %3 : vector<1x384xf32> to vector<8x384xf32>
    %5 = arith.addf %2, %4 : vector<8x384xf32>
    %cst_5 = arith.constant 0.000000e+00 : f32
    %6 = vector.broadcast %cst_5 : f32 to vector<8x384xf32>
    %7 = arith.maximumf %5, %6 : vector<8x384xf32>
    %8 = arith.truncf %7 : vector<8x384xf32> to vector<8x384xbf16>
    %c0_6 = arith.constant 0 : index
    %c0_7 = arith.constant 0 : index
    %9 = vector.load %arg4[%c0_6, %c0_7] : memref<384x384xbf16, #tpu.memory_space<vmem>>, vector<384x384xbf16>
    %cst_8 = arith.constant dense<0.000000e+00> : vector<8x384xf32>
    %10 = tpu.matmul %8, %9, %cst_8 {dimension_numbers = #tpu.dot_dimension_numbers<[1], [0], [0], [1], [0, 0, 1, 1], [], []>} : vector<8x384xbf16>, vector<384x384xbf16>, vector<8x384xf32> -> vector<8x384xf32>
    %c0_9 = arith.constant 0 : index
    %c0_10 = arith.constant 0 : index
    %11 = vector.load %arg5[%c0_9, %c0_10] : memref<1x384xf32, #tpu.memory_space<vmem>>, vector<1x384xf32>
    %12 = vector.broadcast %11 : vector<1x384xf32> to vector<8x384xf32>
    %13 = arith.addf %10, %12 : vector<8x384xf32>
    %cst_11 = arith.constant 0.000000e+00 : f32
    %14 = vector.broadcast %cst_11 : f32 to vector<8x384xf32>
    %15 = arith.maximumf %13, %14 : vector<8x384xf32>
    %16 = arith.truncf %15 : vector<8x384xf32> to vector<8x384xbf16>
    %c0_12 = arith.constant 0 : index
    %c0_13 = arith.constant 0 : index
    %17 = vector.load %arg6[%c0_12, %c0_13] : memref<384x384xbf16, #tpu.memory_space<vmem>>, vector<384x384xbf16>
    %cst_14 = arith.constant dense<0.000000e+00> : vector<8x384xf32>
    %18 = tpu.matmul %16, %17, %cst_14 {dimension_numbers = #tpu.dot_dimension_numbers<[1], [0], [0], [1], [0, 0, 1, 1], [], []>} : vector<8x384xbf16>, vector<384x384xbf16>, vector<8x384xf32> -> vector<8x384xf32>
    %c0_15 = arith.constant 0 : index
    %c0_16 = arith.constant 0 : index
    %19 = vector.load %arg7[%c0_15, %c0_16] : memref<1x384xf32, #tpu.memory_space<vmem>>, vector<1x384xf32>
    %20 = vector.broadcast %19 : vector<1x384xf32> to vector<8x384xf32>
    %21 = arith.addf %18, %20 : vector<8x384xf32>
    %cst_17 = arith.constant 0.000000e+00 : f32
    %22 = vector.broadcast %cst_17 : f32 to vector<8x384xf32>
    %23 = arith.maximumf %21, %22 : vector<8x384xf32>
    %24 = arith.truncf %23 : vector<8x384xf32> to vector<8x384xbf16>
    %c0_18 = arith.constant 0 : index
    %c0_19 = arith.constant 0 : index
    %25 = vector.load %arg8[%c0_18, %c0_19] : memref<384x8xbf16, #tpu.memory_space<vmem>>, vector<384x8xbf16>
    %cst_20 = arith.constant dense<0.000000e+00> : vector<8x8xf32>
    %26 = tpu.matmul %24, %25, %cst_20 {dimension_numbers = #tpu.dot_dimension_numbers<[1], [0], [0], [1], [0, 0, 1, 1], [], []>} : vector<8x384xbf16>, vector<384x8xbf16>, vector<8x8xf32> -> vector<8x8xf32>
    %c0_21 = arith.constant 0 : index
    %c0_22 = arith.constant 0 : index
    %27 = vector.load %arg9[%c0_21, %c0_22] : memref<1x8xf32, #tpu.memory_space<vmem>>, vector<1x8xf32>
    %28 = vector.broadcast %27 : vector<1x8xf32> to vector<8x8xf32>
    %29 = arith.addf %26, %28 : vector<8x8xf32>
    %30 = arith.negf %29 : vector<8x8xf32>
    %31 = math.exp %30 : vector<8x8xf32>
    %cst_23 = arith.constant 1.000000e+00 : f32
    %32 = vector.broadcast %cst_23 : f32 to vector<8x8xf32>
    %33 = arith.addf %32, %31 : vector<8x8xf32>
    %34 = arith.divf %32, %33 : vector<8x8xf32>
    %c0_24 = arith.constant 0 : index
    %c0_25 = arith.constant 0 : index
    %35 = vector.load %arg10[%c0_24, %c0_25] : memref<8x8xf32, #tpu.memory_space<vmem>>, vector<8x8xf32>
    tpu.vector_store %arg10[%c0_24, %c0_25], %34 {strides = array<i32>} : memref<8x8xf32, #tpu.memory_space<vmem>>, vector<8x8xf32>,
    return
  }
  func.func @transform_0(%arg0: i32) -> (i32, i32) {
    %c0_i32 = arith.constant 0 : i32
    %c0_i32_0 = arith.constant 0 : i32
    return %arg0, %c0_i32 : i32, i32
  }
  func.func @transform_1(%arg0: i32) -> (i32, i32) {
    %c0_i32 = arith.constant 0 : i32
    %c0_i32_0 = arith.constant 0 : i32
    %c0_i32_1 = arith.constant 0 : i32
    return %c0_i32, %c0_i32_0 : i32, i32
  }
  func.func @transform_2(%arg0: i32) -> (i32, i32) {
    %c0_i32 = arith.constant 0 : i32
    %c0_i32_0 = arith.constant 0 : i32
    %c0_i32_1 = arith.constant 0 : i32
    return %c0_i32, %c0_i32_0 : i32, i32
  }
  func.func @transform_3(%arg0: i32) -> (i32, i32) {
    %c0_i32 = arith.constant 0 : i32
    %c0_i32_0 = arith.constant 0 : i32
    %c0_i32_1 = arith.constant 0 : i32
    return %c0_i32, %c0_i32_0 : i32, i32
  }
  func.func @transform_4(%arg0: i32) -> (i32, i32) {
    %c0_i32 = arith.constant 0 : i32
    %c0_i32_0 = arith.constant 0 : i32
    %c0_i32_1 = arith.constant 0 : i32
    return %c0_i32, %c0_i32_0 : i32, i32
  }
  func.func @transform_5(%arg0: i32) -> (i32, i32) {
    %c0_i32 = arith.constant 0 : i32
    %c0_i32_0 = arith.constant 0 : i32
    %c0_i32_1 = arith.constant 0 : i32
    return %c0_i32, %c0_i32_0 : i32, i32
  }
  func.func @transform_6(%arg0: i32) -> (i32, i32) {
    %c0_i32 = arith.constant 0 : i32
    %c0_i32_0 = arith.constant 0 : i32
    %c0_i32_1 = arith.constant 0 : i32
    return %c0_i32, %c0_i32_0 : i32, i32
  }
  func.func @transform_7(%arg0: i32) -> (i32, i32) {
    %c0_i32 = arith.constant 0 : i32
    %c0_i32_0 = arith.constant 0 : i32
    %c0_i32_1 = arith.constant 0 : i32
    return %c0_i32, %c0_i32_0 : i32, i32
  }
  func.func @transform_8(%arg0: i32) -> (i32, i32) {
    %c0_i32 = arith.constant 0 : i32
    %c0_i32_0 = arith.constant 0 : i32
    %c0_i32_1 = arith.constant 0 : i32
    return %c0_i32, %c0_i32_0 : i32, i32
  }
  func.func @transform_9(%arg0: i32) -> (i32, i32) {
    %c0_i32 = arith.constant 0 : i32
    %c0_i32_0 = arith.constant 0 : i32
    return %arg0, %c0_i32 : i32, i32
  }
}

</mosaic_0001>

<llo_original>
// kernel: outer_pnn_forward.1
$region0: #{outer_pnn_forward.1}
  #allocation0 [shape = 'u32[]', space=smem, size = 0x4, offset = 0x4, fixed_abs, tag = 'smem constant byte address 0x4 - core index']
  #allocation1 [shape = 'u32[144,128]{1,0:T(1,128)}', space=vmem, size = 0x12000, scoped, tag = 'internal scratch']
  %s0 = inlined_call_operand.vmem [shape: bf16[8,40], index: 0, kind: input, shape index: {}]
  %s1 = inlined_call_operand.vmem [shape: bf16[40,384], index: 1, kind: input, shape index: {}]
  %s2 = inlined_call_operand.vmem [shape: f32[1,384], index: 2, kind: input, shape index: {}]
  %s3 = inlined_call_operand.vmem [shape: bf16[384,384], index: 3, kind: input, shape index: {}]
  %s4 = inlined_call_operand.vmem [shape: f32[1,384], index: 4, kind: input, shape index: {}]
  %s5 = inlined_call_operand.vmem [shape: bf16[384,384], index: 5, kind: input, shape index: {}]
  %s6 = inlined_call_operand.vmem [shape: f32[1,384], index: 6, kind: input, shape index: {}]
  %s7 = inlined_call_operand.vmem [shape: bf16[384,8], index: 7, kind: input, shape index: {}]
  %s8 = inlined_call_operand.vmem [shape: f32[1,8], index: 8, kind: input, shape index: {}]
  %s9 = inlined_call_operand.vmem [shape: f32[8,8], index: 9, kind: output, shape index: {}]
  %s10 = sld [smem:[#allocation0]]
  $region46: #{outer_pnn_forward.1} parent=0
    _
  %s12 = ssub.s32 1, %s10
  %s13 = scalar_select 0, %s12, %s10
  // Predicated region
  $region2: #{outer_pnn_forward.1} parent=0 // pred_check
    _
  $region3: #{outer_pnn_forward.1} parent=0 // pred_check_branch
    %15 = sbr.rel (0) target = $region5
  $region4: #{outer_pnn_forward.1} parent=0 // pred_region
    _
  $region5: #{outer_pnn_forward.1} parent=0 // pred_fallthru
    _
  // Predicated region
  $region6: #{outer_pnn_forward.1} parent=0 // pred_check
    _
  $region7: #{outer_pnn_forward.1} parent=0 // pred_check_branch
    %17 = sbr.rel (0) target = $region9
  $region8: #{outer_pnn_forward.1} parent=0 // pred_region
    _
  $region9: #{outer_pnn_forward.1} parent=0 // pred_fallthru
    _
  // Predicated region
  $region10: #{outer_pnn_forward.1} parent=0 // pred_check
    _
  $region11: #{outer_pnn_forward.1} parent=0 // pred_check_branch
    %19 = sbr.rel (0) target = $region13
  $region12: #{outer_pnn_forward.1} parent=0 // pred_region
    _
  $region13: #{outer_pnn_forward.1} parent=0 // pred_fallthru
    _
  // Predicated region
  $region14: #{outer_pnn_forward.1} parent=0 // pred_check
    _
  $region15: #{outer_pnn_forward.1} parent=0 // pred_check_branch
    %21 = sbr.rel (0) target = $region17
  $region16: #{outer_pnn_forward.1} parent=0 // pred_region
    _
  $region17: #{outer_pnn_forward.1} parent=0 // pred_fallthru
    _
  // Predicated region
  $region18: #{outer_pnn_forward.1} parent=0 // pred_check
    _
  $region19: #{outer_pnn_forward.1} parent=0 // pred_check_branch
    %23 = sbr.rel (0) target = $region21
  $region20: #{outer_pnn_forward.1} parent=0 // pred_region
    _
  $region21: #{outer_pnn_forward.1} parent=0 // pred_fallthru
    _
  // Predicated region
  $region22: #{outer_pnn_forward.1} parent=0 // pred_check
    _
  $region23: #{outer_pnn_forward.1} parent=0 // pred_check_branch
    %25 = sbr.rel (0) target = $region25
  $region24: #{outer_pnn_forward.1} parent=0 // pred_region
    _
  $region25: #{outer_pnn_forward.1} parent=0 // pred_fallthru
    _
  // Predicated region
  $region26: #{outer_pnn_forward.1} parent=0 // pred_check
    _
  $region27: #{outer_pnn_forward.1} parent=0 // pred_check_branch
    %27 = sbr.rel (0) target = $region29
  $region28: #{outer_pnn_forward.1} parent=0 // pred_region
    _
  $region29: #{outer_pnn_forward.1} parent=0 // pred_fallthru
    _
  // Predicated region
  $region30: #{outer_pnn_forward.1} parent=0 // pred_check
    _
  $region31: #{outer_pnn_forward.1} parent=0 // pred_check_branch
    %29 = sbr.rel (0) target = $region33
  $region32: #{outer_pnn_forward.1} parent=0 // pred_region
    _
  $region33: #{outer_pnn_forward.1} parent=0 // pred_fallthru
    _
  // Predicated region
  $region34: #{outer_pnn_forward.1} parent=0 // pred_check
    _
  $region35: #{outer_pnn_forward.1} parent=0 // pred_check_branch
    %31 = sbr.rel (0) target = $region37
  $region36: #{outer_pnn_forward.1} parent=0 // pred_region
    _
  $region37: #{outer_pnn_forward.1} parent=0 // pred_fallthru
    _
  %v33 = vld [vmem:[%s0] sm:$0xf]
  %v34 = vld [vmem:[%s1] sm:$0xff]
  %v35 = vld [vmem:[%s1 + $0x8] sm:$0xf]
  %v36 = vld [vmem:[%s1 + $0xc] sm:$0xff]
  %v37 = vld [vmem:[%s1 + $0x14] sm:$0xf]
  %v38 = vld [vmem:[%s1 + $0x18] sm:$0xff]
  %v39 = vld [vmem:[%s1 + $0x20] sm:$0xf]
  %v40 = vld [vmem:[%s1 + $0x24] sm:$0xff]
  %v41 = vld [vmem:[%s1 + $0x2c] sm:$0xf]
  %v42 = vld [vmem:[%s1 + $0x30] sm:$0xff]
  %v43 = vld [vmem:[%s1 + $0x38] sm:$0xf]
  %v44 = vld [vmem:[%s2] sm:$0x7]
  %v46 = vlaneseq
  %v47 = vshrl.u32 %v46, 7
  %v48 = vsub.s32 0, %v47
  %v49 = vrot.slane %v44, %v48
  %v50 = vlaneseq
  %v51 = vshrl.u32 %v50, 7
  %v52 = vsub.s32 1, %v51
  %v53 = vrot.slane %v44, %v52
  %v54 = vlaneseq
  %v55 = vshrl.u32 %v54, 7
  %v56 = vsub.s32 2, %v55
  %v57 = vrot.slane %v44, %v56
  %v71 = vunpack.c.l.b16 %v34
  %v72 = vunpack.c.h.b16 %v34
  %v73 = vunpack.c.l.b16 %v35
  %v74 = vunpack.c.l.b16 %v36
  %v75 = vunpack.c.h.b16 %v36
  %v76 = vunpack.c.l.b16 %v37
  %v77 = vunpack.c.l.b16 %v38
  %v78 = vunpack.c.h.b16 %v38
  %v79 = vunpack.c.l.b16 %v39
  %v80 = vunpack.c.l.b16 %v40
  %v81 = vunpack.c.h.b16 %v40
  %v82 = vunpack.c.l.b16 %v41
  %v83 = vunpack.c.l.b16 %v42
  %v84 = vunpack.c.h.b16 %v42
  %v85 = vunpack.c.l.b16 %v43
  %v86 = vpack.c.b16 %v74, %v71
  %v87 = vpack.c.b16 %v75, %v72
  %v88 = vpack.c.b16 %v76, %v73
  %v89 = vpack.c.b16 %v80, %v77
  %v90 = vpack.c.b16 %v81, %v78
  %v91 = vpack.c.b16 %v82, %v79
  %v92 = vpack.c.b16 %v83, %v83
  %v93 = vpack.c.b16 %v84, %v84
  %v94 = vpack.c.b16 %v85, %v85
  %vm101 = vcmask 326656
  %v103 = vsel %vm101, %v33, 0
  %vm105 = vcmask 1043456
  %v107 = vsel %vm105, %v92, 0
  %v110 = vsel %vm105, %v93, 0
  %v113 = vsel %vm105, %v94, 0
  %115 = vmatprep.subr.bf16.mxu0 %v87
  %116 = vmatpush1.bf16.msra.mxu0 %v86
  %117 = vmatprep.subr.bf16.mxu0 %v90
  %118 = vmatpush1.bf16.msra.mxu0 %v89
  %119 = vmatprep.subr.bf16.mxu0 %v110
  %120 = vmatpush1.bf16.msra.mxu0 %v107
  %121 = vmatprep.subr.bf16.mxu0 0
  %122 = vmatpush1.bf16.msra.mxu0 0
  %123 = vmatprep.subr.bf16.mxu0 0
  %124 = vmatpush1.bf16.msra.mxu0 0
  %125 = vmatprep.subr.bf16.mxu0 0
  %126 = vmatpush1.bf16.msra.mxu0 0
  %127 = vmatprep.subr.bf16.mxu0 0
  %128 = vmatpush1.bf16.msra.mxu0 0
  %129 = vmatprep.subr.bf16.mxu0 0
  %130 = vmatpush1.bf16.msra.mxu0 0
  %131 = vmatprep.subr.bf16.mxu0 0
  %132 = vmatpush1.bf16.msra.mxu0 0
  %133 = vmatprep.subr.bf16.mxu0 0
  %134 = vmatpush1.bf16.msra.mxu0 0
  %135 = vmatprep.subr.bf16.mxu0 0
  %136 = vmatpush1.bf16.msra.mxu0 0
  %137 = vmatprep.subr.bf16.mxu0 0
  %138 = vmatpush1.bf16.msra.mxu0 0
  %139 = vmatprep.subr.bf16.mxu0 0
  %140 = vmatpush1.bf16.msra.mxu0 0
  %141 = vmatprep.subr.bf16.mxu0 0
  %142 = vmatpush1.bf16.msra.mxu0 0
  %143 = vmatprep.subr.bf16.mxu0 0
  %144 = vmatpush1.bf16.msra.mxu0 0
  %145 = vmatprep.subr.bf16.mxu0 0
  %146 = vmatpush1.bf16.msra.mxu0 0
  %147 = vmatprep.mubr.bf16.mxu0 0
  %148 = vmatmul.mubr.bf16.gmra.mrb[0].mxu0 %v103
  %v149 = vpop.f32.mrb[0].mxu0
  %v150 = vadd.f32 %v49, %v149
  %v151 = vpop.f32.mrb[0].mxu0
  %v152 = vadd.f32 %v53, %v151
  %v153 = vpop.f32.mrb[0].mxu0
  %v154 = vpop.f32.mrb[0].mxu0
  %155 = vdwg.mxu0
  %156 = vmatprep.subr.bf16.mxu0 0
  %157 = vmatpush1.bf16.msra.mxu0 %v88
  %158 = vmatprep.subr.bf16.mxu0 0
  %159 = vmatpush1.bf16.msra.mxu0 %v91
  %160 = vmatprep.subr.bf16.mxu0 0
  %161 = vmatpush1.bf16.msra.mxu0 %v113
  %162 = vmatprep.subr.bf16.mxu0 0
  %163 = vmatpush1.bf16.msra.mxu0 0
  %164 = vmatprep.subr.bf16.mxu0 0
  %165 = vmatpush1.bf16.msra.mxu0 0
  %166 = vmatprep.subr.bf16.mxu0 0
  %167 = vmatpush1.bf16.msra.mxu0 0
  %168 = vmatprep.subr.bf16.mxu0 0
  %169 = vmatpush1.bf16.msra.mxu0 0
  %170 = vmatprep.subr.bf16.mxu0 0
  %171 = vmatpush1.bf16.msra.mxu0 0
  %172 = vmatprep.subr.bf16.mxu0 0
  %173 = vmatpush1.bf16.msra.mxu0 0
  %174 = vmatprep.subr.bf16.mxu0 0
  %175 = vmatpush1.bf16.msra.mxu0 0
  %176 = vmatprep.subr.bf16.mxu0 0
  %177 = vmatpush1.bf16.msra.mxu0 0
  %178 = vmatprep.subr.bf16.mxu0 0
  %179 = vmatpush1.bf16.msra.mxu0 0
  %180 = vmatprep.subr.bf16.mxu0 0
  %181 = vmatpush1.bf16.msra.mxu0 0
  %182 = vmatprep.subr.bf16.mxu0 0
  %183 = vmatpush1.bf16.msra.mxu0 0
  %184 = vmatprep.subr.bf16.mxu0 0
  %185 = vmatpush1.bf16.msra.mxu0 0
  %186 = vmatprep.subr.bf16.mxu0 0
  %187 = vmatpush1.bf16.msra.mxu0 0
  %188 = vmatprep.mubr.bf16.mxu0 0
  %189 = vmatmul.mubr.bf16.gmra.mrb[0].mxu0 %v103
  %v190 = vpop.f32.mrb[0].mxu0
  %v191 = vadd.f32 %v57, %v190
  %v192 = vpop.f32.mrb[0].mxu0
  %v193 = vpop.f32.mrb[0].mxu0
  %v194 = vpop.f32.mrb[0].mxu0
  %195 = vdwg.mxu0
  %v196 = vmax.f32 %v150, 0.0
  %v197 = vmax.f32 %v152, 0.0
  %v198 = vmax.f32 %v191, 0.0
  %v199 = vpack.c.bf16 %v196, %v196
  %v200 = vpack.c.bf16 %v197, %v197
  %v201 = vpack.c.bf16 %v198, %v198
  %v202 = vld [vmem:[%s3] sm:$0xff]
  %v203 = vld [vmem:[%s3 + $0x8] sm:$0xf]
  %v204 = vld [vmem:[%s3 + $0xc] sm:$0xff]
  %v205 = vld [vmem:[%s3 + $0x14] sm:$0xf]
  %v206 = vld [vmem:[%s3 + $0x18] sm:$0xff]
  %v207 = vld [vmem:[%s3 + $0x20] sm:$0xf]
  %v208 = vld [vmem:[%s3 + $0x24] sm:$0xff]
  %v209 = vld [vmem:[%s3 + $0x2c] sm:$0xf]
  %v210 = vld [vmem:[%s3 + $0x30] sm:$0xff]
  %v211 = vld [vmem:[%s3 + $0x38] sm:$0xf]
  %v212 = vld [vmem:[%s3 + $0x3c] sm:$0xff]
  %v213 = vld [vmem:[%s3 + $0x44] sm:$0xf]
  %v214 = vld [vmem:[%s3 + $0x48] sm:$0xff]
  %v215 = vld [vmem:[%s3 + $0x50] sm:$0xf]
  %v216 = vld [vmem:[%s3 + $0x54] sm:$0xff]
  %v217 = vld [vmem:[%s3 + $0x5c] sm:$0xf]
  %v218 = vld [vmem:[%s3 + $0x60] sm:$0xff]
  %v219 = vld [vmem:[%s3 + $0x68] sm:$0xf]
  %v220 = vld [vmem:[%s3 + $0x6c] sm:$0xff]
  %v221 = vld [vmem:[%s3 + $0x74] sm:$0xf]
  %v222 = vld [vmem:[%s3 + $0x78] sm:$0xff]
  %v223 = vld [vmem:[%s3 + $0x80] sm:$0xf]
  %v224 = vld [vmem:[%s3 + $0x84] sm:$0xff]
  %v225 = vld [vmem:[%s3 + $0x8c] sm:$0xf]
  %v226 = vld [vmem:[%s3 + $0x90] sm:$0xff]
  %v227 = vld [vmem:[%s3 + $0x98] sm:$0xf]
  %v228 = vld [vmem:[%s3 + $0x9c] sm:$0xff]
  %v229 = vld [vmem:[%s3 + $0xa4] sm:$0xf]
  %v230 = vld [vmem:[%s3 + $0xa8] sm:$0xff]
  %v231 = vld [vmem:[%s3 + $0xb0] sm:$0xf]
  %v232 = vld [vmem:[%s3 + $0xb4] sm:$0xff]
  %v233 = vld [vmem:[%s3 + $0xbc] sm:$0xf]
  %v234 = vld [vmem:[%s3 + $0xc0] sm:$0xff]
  %v235 = vld [vmem:[%s3 + $0xc8] sm:$0xf]
  %v236 = vld [vmem:[%s3 + $0xcc] sm:$0xff]
  %v237 = vld [vmem:[%s3 + $0xd4] sm:$0xf]
  %v238 = vld [vmem:[%s3 + $0xd8] sm:$0xff]
  %v239 = vld [vmem:[%s3 + $0xe0] sm:$0xf]
  %v240 = vld [vmem:[%s3 + $0xe4] sm:$0xff]
  %v241 = vld [vmem:[%s3 + $0xec] sm:$0xf]
  %v242 = vld [vmem:[%s3 + $0xf0] sm:$0xff]
  %v243 = vld [vmem:[%s3 + $0xf8] sm:$0xf]
  %v244 = vld [vmem:[%s3 + $0xfc] sm:$0xff]
  %v245 = vld [vmem:[%s3 + $0x104] sm:$0xf]
  %v246 = vld [vmem:[%s3 + $0x108] sm:$0xff]
  %v247 = vld [vmem:[%s3 + $0x110] sm:$0xf]
  %v248 = vld [vmem:[%s3 + $0x114] sm:$0xff]
  %v249 = vld [vmem:[%s3 + $0x11c] sm:$0xf]
  %v250 = vld [vmem:[%s3 + $0x120] sm:$0xff]
  %v251 = vld [vmem:[%s3 + $0x128] sm:$0xf]
  %v252 = vld [vmem:[%s3 + $0x12c] sm:$0xff]
  %v253 = vld [vmem:[%s3 + $0x134] sm:$0xf]
  %v254 = vld [vmem:[%s3 + $0x138] sm:$0xff]
  %v255 = vld [vmem:[%s3 + $0x140] sm:$0xf]
  %v256 = vld [vmem:[%s3 + $0x144] sm:$0xff]
  %v257 = vld [vmem:[%s3 + $0x14c] sm:$0xf]
  %v258 = vld [vmem:[%s3 + $0x150] sm:$0xff]
  %v259 = vld [vmem:[%s3 + $0x158] sm:$0xf]
  %v260 = vld [vmem:[%s3 + $0x15c] sm:$0xff]
  %v261 = vld [vmem:[%s3 + $0x164] sm:$0xf]
  %v262 = vld [vmem:[%s3 + $0x168] sm:$0xff]
  %v263 = vld [vmem:[%s3 + $0x170] sm:$0xf]
  %v264 = vld [vmem:[%s3 + $0x174] sm:$0xff]
  %v265 = vld [vmem:[%s3 + $0x17c] sm:$0xf]
  %v266 = vld [vmem:[%s3 + $0x180] sm:$0xff]
  %v267 = vld [vmem:[%s3 + $0x188] sm:$0xf]
  %v268 = vld [vmem:[%s3 + $0x18c] sm:$0xff]
  %v269 = vld [vmem:[%s3 + $0x194] sm:$0xf]
  %v270 = vld [vmem:[%s3 + $0x198] sm:$0xff]
  %v271 = vld [vmem:[%s3 + $0x1a0] sm:$0xf]
  %v272 = vld [vmem:[%s3 + $0x1a4] sm:$0xff]
  %v273 = vld [vmem:[%s3 + $0x1ac] sm:$0xf]
  %v274 = vld [vmem:[%s3 + $0x1b0] sm:$0xff]
  %v275 = vld [vmem:[%s3 + $0x1b8] sm:$0xf]
  %v276 = vld [vmem:[%s3 + $0x1bc] sm:$0xff]
  %v277 = vld [vmem:[%s3 + $0x1c4] sm:$0xf]
  %v278 = vld [vmem:[%s3 + $0x1c8] sm:$0xff]
  %v279 = vld [vmem:[%s3 + $0x1d0] sm:$0xf]
  %v280 = vld [vmem:[%s3 + $0x1d4] sm:$0xff]
  %v281 = vld [vmem:[%s3 + $0x1dc] sm:$0xf]
  %v282 = vld [vmem:[%s3 + $0x1e0] sm:$0xff]
  %v283 = vld [vmem:[%s3 + $0x1e8] sm:$0xf]
  %v284 = vld [vmem:[%s3 + $0x1ec] sm:$0xff]
  %v285 = vld [vmem:[%s3 + $0x1f4] sm:$0xf]
  %v286 = vld [vmem:[%s3 + $0x1f8] sm:$0xff]
  %v287 = vld [vmem:[%s3 + $0x200] sm:$0xf]
  %v288 = vld [vmem:[%s3 + $0x204] sm:$0xff]
  %v289 = vld [vmem:[%s3 + $0x20c] sm:$0xf]
  %v290 = vld [vmem:[%s3 + $0x210] sm:$0xff]
  %v291 = vld [vmem:[%s3 + $0x218] sm:$0xf]
  %v292 = vld [vmem:[%s3 + $0x21c] sm:$0xff]
  %v293 = vld [vmem:[%s3 + $0x224] sm:$0xf]
  %v294 = vld [vmem:[%s3 + $0x228] sm:$0xff]
  %v295 = vld [vmem:[%s3 + $0x230] sm:$0xf]
  %v296 = vld [vmem:[%s3 + $0x234] sm:$0xff]
  %v297 = vld [vmem:[%s3 + $0x23c] sm:$0xf]
  %v298 = vld [vmem:[%s4] sm:$0x7]
  %v300 = vlaneseq
  %v301 = vshrl.u32 %v300, 7
  %v302 = vsub.s32 0, %v301
  %v303 = vrot.slane %v298, %v302
  %v304 = vlaneseq
  %v305 = vshrl.u32 %v304, 7
  %v306 = vsub.s32 1, %v305
  %v307 = vrot.slane %v298, %v306
  %v308 = vlaneseq
  %v309 = vshrl.u32 %v308, 7
  %v310 = vsub.s32 2, %v309
  %v311 = vrot.slane %v298, %v310
  %v411 = vunpack.c.l.b16 %v202
  %v412 = vunpack.c.h.b16 %v202
  %v413 = vunpack.c.l.b16 %v203
  %v414 = vunpack.c.l.b16 %v204
  %v415 = vunpack.c.h.b16 %v204
  %v416 = vunpack.c.l.b16 %v205
  %v417 = vunpack.c.l.b16 %v206
  %v418 = vunpack.c.h.b16 %v206
  %v419 = vunpack.c.l.b16 %v207
  %v420 = vunpack.c.l.b16 %v208
  %v421 = vunpack.c.h.b16 %v208
  %v422 = vunpack.c.l.b16 %v209
  %v423 = vunpack.c.l.b16 %v210
  %v424 = vunpack.c.h.b16 %v210
  %v425 = vunpack.c.l.b16 %v211
  %v426 = vunpack.c.l.b16 %v212
  %v427 = vunpack.c.h.b16 %v212
  %v428 = vunpack.c.l.b16 %v213
  %v429 = vunpack.c.l.b16 %v214
  %v430 = vunpack.c.h.b16 %v214
  %v431 = vunpack.c.l.b16 %v215
  %v432 = vunpack.c.l.b16 %v216
  %v433 = vunpack.c.h.b16 %v216
  %v434 = vunpack.c.l.b16 %v217
  %v435 = vunpack.c.l.b16 %v218
  %v436 = vunpack.c.h.b16 %v218
  %v437 = vunpack.c.l.b16 %v219
  %v438 = vunpack.c.l.b16 %v220
  %v439 = vunpack.c.h.b16 %v220
  %v440 = vunpack.c.l.b16 %v221
  %v441 = vunpack.c.l.b16 %v222
  %v442 = vunpack.c.h.b16 %v222
  %v443 = vunpack.c.l.b16 %v223
  %v444 = vunpack.c.l.b16 %v224
  %v445 = vunpack.c.h.b16 %v224
  %v446 = vunpack.c.l.b16 %v225
  %v447 = vunpack.c.l.b16 %v226
  %v448 = vunpack.c.h.b16 %v226
  %v449 = vunpack.c.l.b16 %v227
  %v450 = vunpack.c.l.b16 %v228
  %v451 = vunpack.c.h.b16 %v228
  %v452 = vunpack.c.l.b16 %v229
  %v453 = vunpack.c.l.b16 %v230
  %v454 = vunpack.c.h.b16 %v230
  %v455 = vunpack.c.l.b16 %v231
  %v456 = vunpack.c.l.b16 %v232
  %v457 = vunpack.c.h.b16 %v232
  %v458 = vunpack.c.l.b16 %v233
  %v459 = vunpack.c.l.b16 %v234
  %v460 = vunpack.c.h.b16 %v234
  %v461 = vunpack.c.l.b16 %v235
  %v462 = vunpack.c.l.b16 %v236
  %v463 = vunpack.c.h.b16 %v236
  %v464 = vunpack.c.l.b16 %v237
  %v465 = vunpack.c.l.b16 %v238
  %v466 = vunpack.c.h.b16 %v238
  %v467 = vunpack.c.l.b16 %v239
  %v468 = vunpack.c.l.b16 %v240
  %v469 = vunpack.c.h.b16 %v240
  %v470 = vunpack.c.l.b16 %v241
  %v471 = vunpack.c.l.b16 %v242
  %v472 = vunpack.c.h.b16 %v242
  %v473 = vunpack.c.l.b16 %v243
  %v474 = vunpack.c.l.b16 %v244
  %v475 = vunpack.c.h.b16 %v244
  %v476 = vunpack.c.l.b16 %v245
  %v477 = vunpack.c.l.b16 %v246
  %v478 = vunpack.c.h.b16 %v246
  %v479 = vunpack.c.l.b16 %v247
  %v480 = vunpack.c.l.b16 %v248
  %v481 = vunpack.c.h.b16 %v248
  %v482 = vunpack.c.l.b16 %v249
  %v483 = vunpack.c.l.b16 %v250
  %v484 = vunpack.c.h.b16 %v250
  %v485 = vunpack.c.l.b16 %v251
  %v486 = vunpack.c.l.b16 %v252
  %v487 = vunpack.c.h.b16 %v252
  %v488 = vunpack.c.l.b16 %v253
  %v489 = vunpack.c.l.b16 %v254
  %v490 = vunpack.c.h.b16 %v254
  %v491 = vunpack.c.l.b16 %v255
  %v492 = vunpack.c.l.b16 %v256
  %v493 = vunpack.c.h.b16 %v256
  %v494 = vunpack.c.l.b16 %v257
  %v495 = vunpack.c.l.b16 %v258
  %v496 = vunpack.c.h.b16 %v258
  %v497 = vunpack.c.l.b16 %v259
  %v498 = vunpack.c.l.b16 %v260
  %v499 = vunpack.c.h.b16 %v260
  %v500 = vunpack.c.l.b16 %v261
  %v501 = vunpack.c.l.b16 %v262
  %v502 = vunpack.c.h.b16 %v262
  %v503 = vunpack.c.l.b16 %v263
  %v504 = vunpack.c.l.b16 %v264
  %v505 = vunpack.c.h.b16 %v264
  %v506 = vunpack.c.l.b16 %v265
  %v507 = vunpack.c.l.b16 %v266
  %v508 = vunpack.c.h.b16 %v266
  %v509 = vunpack.c.l.b16 %v267
  %v510 = vunpack.c.l.b16 %v268
  %v511 = vunpack.c.h.b16 %v268
  %v512 = vunpack.c.l.b16 %v269
  %v513 = vunpack.c.l.b16 %v270
  %v514 = vunpack.c.h.b16 %v270
  %v515 = vunpack.c.l.b16 %v271
  %v516 = vunpack.c.l.b16 %v272
  %v517 = vunpack.c.h.b16 %v272
  %v518 = vunpack.c.l.b16 %v273
  %v519 = vunpack.c.l.b16 %v274
  %v520 = vunpack.c.h.b16 %v274
  %v521 = vunpack.c.l.b16 %v275
  %v522 = vunpack.c.l.b16 %v276
  %v523 = vunpack.c.h.b16 %v276
  %v524 = vunpack.c.l.b16 %v277
  %v525 = vunpack.c.l.b16 %v278
  %v526 = vunpack.c.h.b16 %v278
  %v527 = vunpack.c.l.b16 %v279
  %v528 = vunpack.c.l.b16 %v280
  %v529 = vunpack.c.h.b16 %v280
  %v530 = vunpack.c.l.b16 %v281
  %v531 = vunpack.c.l.b16 %v282
  %v532 = vunpack.c.h.b16 %v282
  %v533 = vunpack.c.l.b16 %v283
  %v534 = vunpack.c.l.b16 %v284
  %v535 = vunpack.c.h.b16 %v284
  %v536 = vunpack.c.l.b16 %v285
  %v537 = vunpack.c.l.b16 %v286
  %v538 = vunpack.c.h.b16 %v286
  %v539 = vunpack.c.l.b16 %v287
  %v540 = vunpack.c.l.b16 %v288
  %v541 = vunpack.c.h.b16 %v288
  %v542 = vunpack.c.l.b16 %v289
  %v543 = vunpack.c.l.b16 %v290
  %v544 = vunpack.c.h.b16 %v290
  %v545 = vunpack.c.l.b16 %v291
  %v546 = vunpack.c.l.b16 %v292
  %v547 = vunpack.c.h.b16 %v292
  %v548 = vunpack.c.l.b16 %v293
  %v549 = vunpack.c.l.b16 %v294
  %v550 = vunpack.c.h.b16 %v294
  %v551 = vunpack.c.l.b16 %v295
  %v552 = vunpack.c.l.b16 %v296
  %v553 = vunpack.c.h.b16 %v296
  %v554 = vunpack.c.l.b16 %v297
  %v555 = vpack.c.b16 %v414, %v411
  %v556 = vpack.c.b16 %v415, %v412
  %v557 = vpack.c.b16 %v416, %v413
  %v558 = vpack.c.b16 %v420, %v417
  %v559 = vpack.c.b16 %v421, %v418
  %v560 = vpack.c.b16 %v422, %v419
  %v561 = vpack.c.b16 %v426, %v423
  %v562 = vpack.c.b16 %v427, %v424
  %v563 = vpack.c.b16 %v428, %v425
  %v564 = vpack.c.b16 %v432, %v429
  %v565 = vpack.c.b16 %v433, %v430
  %v566 = vpack.c.b16 %v434, %v431
  %v567 = vpack.c.b16 %v438, %v435
  %v568 = vpack.c.b16 %v439, %v436
  %v569 = vpack.c.b16 %v440, %v437
  %v570 = vpack.c.b16 %v444, %v441
  %v571 = vpack.c.b16 %v445, %v442
  %v572 = vpack.c.b16 %v446, %v443
  %v573 = vpack.c.b16 %v450, %v447
  %v574 = vpack.c.b16 %v451, %v448
  %v575 = vpack.c.b16 %v452, %v449
  %v576 = vpack.c.b16 %v456, %v453
  %v577 = vpack.c.b16 %v457, %v454
  %v578 = vpack.c.b16 %v458, %v455
  %v579 = vpack.c.b16 %v462, %v459
  %v580 = vpack.c.b16 %v463, %v460
  %v581 = vpack.c.b16 %v464, %v461
  %v582 = vpack.c.b16 %v468, %v465
  %v583 = vpack.c.b16 %v469, %v466
  %v584 = vpack.c.b16 %v470, %v467
  %v585 = vpack.c.b16 %v474, %v471
  %v586 = vpack.c.b16 %v475, %v472
  %v587 = vpack.c.b16 %v476, %v473
  %v588 = vpack.c.b16 %v480, %v477
  %v589 = vpack.c.b16 %v481, %v478
  %v590 = vpack.c.b16 %v482, %v479
  %v591 = vpack.c.b16 %v486, %v483
  %v592 = vpack.c.b16 %v487, %v484
  %v593 = vpack.c.b16 %v488, %v485
  %v594 = vpack.c.b16 %v492, %v489
  %v595 = vpack.c.b16 %v493, %v490
  %v596 = vpack.c.b16 %v494, %v491
  %v597 = vpack.c.b16 %v498, %v495
  %v598 = vpack.c.b16 %v499, %v496
  %v599 = vpack.c.b16 %v500, %v497
  %v600 = vpack.c.b16 %v504, %v501
  %v601 = vpack.c.b16 %v505, %v502
  %v602 = vpack.c.b16 %v506, %v503
  %v603 = vpack.c.b16 %v510, %v507
  %v604 = vpack.c.b16 %v511, %v508
  %v605 = vpack.c.b16 %v512, %v509
  %v606 = vpack.c.b16 %v516, %v513
  %v607 = vpack.c.b16 %v517, %v514
  %v608 = vpack.c.b16 %v518, %v515
  %v609 = vpack.c.b16 %v522, %v519
  %v610 = vpack.c.b16 %v523, %v520
  %v611 = vpack.c.b16 %v524, %v521
  %v612 = vpack.c.b16 %v528, %v525
  %v613 = vpack.c.b16 %v529, %v526
  %v614 = vpack.c.b16 %v530, %v527
  %v615 = vpack.c.b16 %v534, %v531
  %v616 = vpack.c.b16 %v535, %v532
  %v617 = vpack.c.b16 %v536, %v533
  %v618 = vpack.c.b16 %v540, %v537
  %v619 = vpack.c.b16 %v541, %v538
  %v620 = vpack.c.b16 %v542, %v539
  %v621 = vpack.c.b16 %v546, %v543
  %v622 = vpack.c.b16 %v547, %v544
  %v623 = vpack.c.b16 %v548, %v545
  %v624 = vpack.c.b16 %v552, %v549
  %v625 = vpack.c.b16 %v553, %v550
  %v626 = vpack.c.b16 %v554, %v551
  %699 = vmatprep.subr.bf16.mxu0 %v556
  %700 = vmatpush1.bf16.msra.mxu0 %v555
  %701 = vmatprep.subr.bf16.mxu0 %v559
  %702 = vmatpush1.bf16.msra.mxu0 %v558
  %703 = vmatprep.subr.bf16.mxu0 %v562
  %704 = vmatpush1.bf16.msra.mxu0 %v561
  %705 = vmatprep.subr.bf16.mxu0 %v565
  %706 = vmatpush1.bf16.msra.mxu0 %v564
  %707 = vmatprep.subr.bf16.mxu0 %v568
  %708 = vmatpush1.bf16.msra.mxu0 %v567
  %709 = vmatprep.subr.bf16.mxu0 %v571
  %710 = vmatpush1.bf16.msra.mxu0 %v570
  %711 = vmatprep.subr.bf16.mxu0 %v574
  %712 = vmatpush1.bf16.msra.mxu0 %v573
  %713 = vmatprep.subr.bf16.mxu0 %v577
  %714 = vmatpush1.bf16.msra.mxu0 %v576
  %715 = vmatprep.subr.bf16.mxu0 %v580
  %716 = vmatpush1.bf16.msra.mxu0 %v579
  %717 = vmatprep.subr.bf16.mxu0 %v583
  %718 = vmatpush1.bf16.msra.mxu0 %v582
  %719 = vmatprep.subr.bf16.mxu0 %v586
  %720 = vmatpush1.bf16.msra.mxu0 %v585
  %721 = vmatprep.subr.bf16.mxu0 %v589
  %722 = vmatpush1.bf16.msra.mxu0 %v588
  %723 = vmatprep.subr.bf16.mxu0 %v592
  %724 = vmatpush1.bf16.msra.mxu0 %v591
  %725 = vmatprep.subr.bf16.mxu0 %v595
  %726 = vmatpush1.bf16.msra.mxu0 %v594
  %727 = vmatprep.subr.bf16.mxu0 %v598
  %728 = vmatpush1.bf16.msra.mxu0 %v597
  %729 = vmatprep.subr.bf16.mxu0 %v601
  %730 = vmatpush1.bf16.msra.mxu0 %v600
  %731 = vmatprep.mubr.bf16.mxu0 %v200
  %732 = vmatmul.mubr.bf16.gmra.mrb[0].mxu0 %v199
  %v733 = vpop.f32.mrb[0].mxu0
  %v734 = vadd.f32 %v303, %v733
  %v735 = vpop.f32.mrb[0].mxu0
  %v736 = vadd.f32 %v307, %v735
  %v737 = vpop.f32.mrb[0].mxu0
  %v738 = vpop.f32.mrb[0].mxu0
  %739 = vdwg.mxu0
  %740 = vmatprep.subr.bf16.mxu0 %v604
  %741 = vmatpush1.bf16.msra.mxu0 %v603
  %742 = vmatprep.subr.bf16.mxu0 %v607
  %743 = vmatpush1.bf16.msra.mxu0 %v606
  %744 = vmatprep.subr.bf16.mxu0 %v610
  %745 = vmatpush1.bf16.msra.mxu0 %v609
  %746 = vmatprep.subr.bf16.mxu0 %v613
  %747 = vmatpush1.bf16.msra.mxu0 %v612
  %748 = vmatprep.subr.bf16.mxu0 %v616
  %749 = vmatpush1.bf16.msra.mxu0 %v615
  %750 = vmatprep.subr.bf16.mxu0 %v619
  %751 = vmatpush1.bf16.msra.mxu0 %v618
  %752 = vmatprep.subr.bf16.mxu0 %v622
  %753 = vmatpush1.bf16.msra.mxu0 %v621
  %754 = vmatprep.subr.bf16.mxu0 %v625
  %755 = vmatpush1.bf16.msra.mxu0 %v624
  %756 = vmatprep.subr.bf16.mxu0 0
  %757 = vmatpush1.bf16.msra.mxu0 0
  %758 = vmatprep.subr.bf16.mxu0 0
  %759 = vmatpush1.bf16.msra.mxu0 0
  %760 = vmatprep.subr.bf16.mxu0 0
  %761 = vmatpush1.bf16.msra.mxu0 0
  %762 = vmatprep.subr.bf16.mxu0 0
  %763 = vmatpush1.bf16.msra.mxu0 0
  %764 = vmatprep.subr.bf16.mxu0 0
  %765 = vmatpush1.bf16.msra.mxu0 0
  %766 = vmatprep.subr.bf16.mxu0 0
  %767 = vmatpush1.bf16.msra.mxu0 0
  %768 = vmatprep.subr.bf16.mxu0 0
  %769 = vmatpush1.bf16.msra.mxu0 0
  %770 = vmatprep.subr.bf16.mxu0 0
  %771 = vmatpush1.bf16.msra.mxu0 0
  %772 = vmatprep.mubr.bf16.mxu0 0
  %773 = vmatmul.mubr.bf16.gmra.mrb[0].mxu0 %v201
  %v774 = vpop.f32.mrb[0].mxu0
  %v775 = vadd.f32 %v734, %v774
  %v776 = vpop.f32.mrb[0].mxu0
  %v777 = vadd.f32 %v736, %v776
  %v778 = vpop.f32.mrb[0].mxu0
  %v779 = vpop.f32.mrb[0].mxu0
  %780 = vdwg.mxu0
  %781 = vmatprep.subr.bf16.mxu0 0
  %782 = vmatpush1.bf16.msra.mxu0 %v557
  %783 = vmatprep.subr.bf16.mxu0 0
  %784 = vmatpush1.bf16.msra.mxu0 %v560
  %785 = vmatprep.subr.bf16.mxu0 0
  %786 = vmatpush1.bf16.msra.mxu0 %v563
  %787 = vmatprep.subr.bf16.mxu0 0
  %788 = vmatpush1.bf16.msra.mxu0 %v566
  %789 = vmatprep.subr.bf16.mxu0 0
  %790 = vmatpush1.bf16.msra.mxu0 %v569
  %791 = vmatprep.subr.bf16.mxu0 0
  %792 = vmatpush1.bf16.msra.mxu0 %v572
  %793 = vmatprep.subr.bf16.mxu0 0
  %794 = vmatpush1.bf16.msra.mxu0 %v575
  %795 = vmatprep.subr.bf16.mxu0 0
  %796 = vmatpush1.bf16.msra.mxu0 %v578
  %797 = vmatprep.subr.bf16.mxu0 0
  %798 = vmatpush1.bf16.msra.mxu0 %v581
  %799 = vmatprep.subr.bf16.mxu0 0
  %800 = vmatpush1.bf16.msra.mxu0 %v584
  %801 = vmatprep.subr.bf16.mxu0 0
  %802 = vmatpush1.bf16.msra.mxu0 %v587
  %803 = vmatprep.subr.bf16.mxu0 0
  %804 = vmatpush1.bf16.msra.mxu0 %v590
  %805 = vmatprep.subr.bf16.mxu0 0
  %806 = vmatpush1.bf16.msra.mxu0 %v593
  %807 = vmatprep.subr.bf16.mxu0 0
  %808 = vmatpush1.bf16.msra.mxu0 %v596
  %809 = vmatprep.subr.bf16.mxu0 0
  %810 = vmatpush1.bf16.msra.mxu0 %v599
  %811 = vmatprep.subr.bf16.mxu0 0
  %812 = vmatpush1.bf16.msra.mxu0 %v602
  %813 = vmatprep.mubr.bf16.mxu0 %v200
  %814 = vmatmul.mubr.bf16.gmra.mrb[0].mxu0 %v199
  %v815 = vpop.f32.mrb[0].mxu0
  %v816 = vadd.f32 %v311, %v815
  %v817 = vpop.f32.mrb[0].mxu0
  %v818 = vpop.f32.mrb[0].mxu0
  %v819 = vpop.f32.mrb[0].mxu0
  %820 = vdwg.mxu0
  %821 = vmatprep.subr.bf16.mxu0 0
  %822 = vmatpush1.bf16.msra.mxu0 %v605
  %823 = vmatprep.subr.bf16.mxu0 0
  %824 = vmatpush1.bf16.msra.mxu0 %v608
  %825 = vmatprep.subr.bf16.mxu0 0
  %826 = vmatpush1.bf16.msra.mxu0 %v611
  %827 = vmatprep.subr.bf16.mxu0 0
  %828 = vmatpush1.bf16.msra.mxu0 %v614
  %829 = vmatprep.subr.bf16.mxu0 0
  %830 = vmatpush1.bf16.msra.mxu0 %v617
  %831 = vmatprep.subr.bf16.mxu0 0
  %832 = vmatpush1.bf16.msra.mxu0 %v620
  %833 = vmatprep.subr.bf16.mxu0 0
  %834 = vmatpush1.bf16.msra.mxu0 %v623
  %835 = vmatprep.subr.bf16.mxu0 0
  %836 = vmatpush1.bf16.msra.mxu0 %v626
  %837 = vmatprep.subr.bf16.mxu0 0
  %838 = vmatpush1.bf16.msra.mxu0 0
  %839 = vmatprep.subr.bf16.mxu0 0
  %840 = vmatpush1.bf16.msra.mxu0 0
  %841 = vmatprep.subr.bf16.mxu0 0
  %842 = vmatpush1.bf16.msra.mxu0 0
  %843 = vmatprep.subr.bf16.mxu0 0
  %844 = vmatpush1.bf16.msra.mxu0 0
  %845 = vmatprep.subr.bf16.mxu0 0
  %846 = vmatpush1.bf16.msra.mxu0 0
  %847 = vmatprep.subr.bf16.mxu0 0
  %848 = vmatpush1.bf16.msra.mxu0 0
  %849 = vmatprep.subr.bf16.mxu0 0
  %850 = vmatpush1.bf16.msra.mxu0 0
  %851 = vmatprep.subr.bf16.mxu0 0
  %852 = vmatpush1.bf16.msra.mxu0 0
  %853 = vmatprep.mubr.bf16.mxu0 0
  %854 = vmatmul.mubr.bf16.gmra.mrb[0].mxu0 %v201
  %v855 = vpop.f32.mrb[0].mxu0
  %v856 = vadd.f32 %v816, %v855
  %v857 = vpop.f32.mrb[0].mxu0
  %v858 = vpop.f32.mrb[0].mxu0
  %v859 = vpop.f32.mrb[0].mxu0
  %860 = vdwg.mxu0
  %v861 = vmax.f32 %v775, 0.0
  %v862 = vmax.f32 %v777, 0.0
  %v863 = vmax.f32 %v856, 0.0
  %v864 = vpack.c.bf16 %v861, %v861
  %v865 = vpack.c.bf16 %v862, %v862
  %v866 = vpack.c.bf16 %v863, %v863
  %v867 = vld [vmem:[%s5] sm:$0xff]
  %v868 = vld [vmem:[%s5 + $0x8] sm:$0xf]
  %v869 = vld [vmem:[%s5 + $0xc] sm:$0xff]
  %v870 = vld [vmem:[%s5 + $0x14] sm:$0xf]
  %v871 = vld [vmem:[%s5 + $0x18] sm:$0xff]
  %v872 = vld [vmem:[%s5 + $0x20] sm:$0xf]
  %v873 = vld [vmem:[%s5 + $0x24] sm:$0xff]
  %v874 = vld [vmem:[%s5 + $0x2c] sm:$0xf]
  %v875 = vld [vmem:[%s5 + $0x30] sm:$0xff]
  %v876 = vld [vmem:[%s5 + $0x38] sm:$0xf]
  %v877 = vld [vmem:[%s5 + $0x3c] sm:$0xff]
  %v878 = vld [vmem:[%s5 + $0x44] sm:$0xf]
  %v879 = vld [vmem:[%s5 + $0x48] sm:$0xff]
  %v880 = vld [vmem:[%s5 + $0x50] sm:$0xf]
  %v881 = vld [vmem:[%s5 + $0x54] sm:$0xff]
  %v882 = vld [vmem:[%s5 + $0x5c] sm:$0xf]
  %v883 = vld [vmem:[%s5 + $0x60] sm:$0xff]
  %v884 = vld [vmem:[%s5 + $0x68] sm:$0xf]
  %v885 = vld [vmem:[%s5 + $0x6c] sm:$0xff]
  %v886 = vld [vmem:[%s5 + $0x74] sm:$0xf]
  %v887 = vld [vmem:[%s5 + $0x78] sm:$0xff]
  %v888 = vld [vmem:[%s5 + $0x80] sm:$0xf]
  %v889 = vld [vmem:[%s5 + $0x84] sm:$0xff]
  %v890 = vld [vmem:[%s5 + $0x8c] sm:$0xf]
  %v891 = vld [vmem:[%s5 + $0x90] sm:$0xff]
  %v892 = vld [vmem:[%s5 + $0x98] sm:$0xf]
  %v893 = vld [vmem:[%s5 + $0x9c] sm:$0xff]
  %v894 = vld [vmem:[%s5 + $0xa4] sm:$0xf]
  %v895 = vld [vmem:[%s5 + $0xa8] sm:$0xff]
  %v896 = vld [vmem:[%s5 + $0xb0] sm:$0xf]
  %v897 = vld [vmem:[%s5 + $0xb4] sm:$0xff]
  %v898 = vld [vmem:[%s5 + $0xbc] sm:$0xf]
  %v899 = vld [vmem:[%s5 + $0xc0] sm:$0xff]
  %v900 = vld [vmem:[%s5 + $0xc8] sm:$0xf]
  %v901 = vld [vmem:[%s5 + $0xcc] sm:$0xff]
  %v902 = vld [vmem:[%s5 + $0xd4] sm:$0xf]
  %v903 = vld [vmem:[%s5 + $0xd8] sm:$0xff]
  %v904 = vld [vmem:[%s5 + $0xe0] sm:$0xf]
  %v905 = vld [vmem:[%s5 + $0xe4] sm:$0xff]
  %v906 = vld [vmem:[%s5 + $0xec] sm:$0xf]
  %v907 = vld [vmem:[%s5 + $0xf0] sm:$0xff]
  %v908 = vld [vmem:[%s5 + $0xf8] sm:$0xf]
  %v909 = vld [vmem:[%s5 + $0xfc] sm:$0xff]
  %v910 = vld [vmem:[%s5 + $0x104] sm:$0xf]
  %v911 = vld [vmem:[%s5 + $0x108] sm:$0xff]
  %v912 = vld [vmem:[%s5 + $0x110] sm:$0xf]
  %v913 = vld [vmem:[%s5 + $0x114] sm:$0xff]
  %v914 = vld [vmem:[%s5 + $0x11c] sm:$0xf]
  %v915 = vld [vmem:[%s5 + $0x120] sm:$0xff]
  %v916 = vld [vmem:[%s5 + $0x128] sm:$0xf]
  %v917 = vld [vmem:[%s5 + $0x12c] sm:$0xff]
  %v918 = vld [vmem:[%s5 + $0x134] sm:$0xf]
  %v919 = vld [vmem:[%s5 + $0x138] sm:$0xff]
  %v920 = vld [vmem:[%s5 + $0x140] sm:$0xf]
  %v921 = vld [vmem:[%s5 + $0x144] sm:$0xff]
  %v922 = vld [vmem:[%s5 + $0x14c] sm:$0xf]
  %v923 = vld [vmem:[%s5 + $0x150] sm:$0xff]
  %v924 = vld [vmem:[%s5 + $0x158] sm:$0xf]
  %v925 = vld [vmem:[%s5 + $0x15c] sm:$0xff]
  %v926 = vld [vmem:[%s5 + $0x164] sm:$0xf]
  %v927 = vld [vmem:[%s5 + $0x168] sm:$0xff]
  %v928 = vld [vmem:[%s5 + $0x170] sm:$0xf]
  %v929 = vld [vmem:[%s5 + $0x174] sm:$0xff]
  %v930 = vld [vmem:[%s5 + $0x17c] sm:$0xf]
  %v931 = vld [vmem:[%s5 + $0x180] sm:$0xff]
  %v932 = vld [vmem:[%s5 + $0x188] sm:$0xf]
  %v933 = vld [vmem:[%s5 + $0x18c] sm:$0xff]
  %v934 = vld [vmem:[%s5 + $0x194] sm:$0xf]
  %v935 = vld [vmem:[%s5 + $0x198] sm:$0xff]
  %v936 = vld [vmem:[%s5 + $0x1a0] sm:$0xf]
  %v937 = vld [vmem:[%s5 + $0x1a4] sm:$0xff]
  %v938 = vld [vmem:[%s5 + $0x1ac] sm:$0xf]
  %v939 = vld [vmem:[%s5 + $0x1b0] sm:$0xff]
  %v940 = vld [vmem:[%s5 + $0x1b8] sm:$0xf]
  %v941 = vld [vmem:[%s5 + $0x1bc] sm:$0xff]
  %v942 = vld [vmem:[%s5 + $0x1c4] sm:$0xf]
  %v943 = vld [vmem:[%s5 + $0x1c8] sm:$0xff]
  %v944 = vld [vmem:[%s5 + $0x1d0] sm:$0xf]
  %v945 = vld [vmem:[%s5 + $0x1d4] sm:$0xff]
  %v946 = vld [vmem:[%s5 + $0x1dc] sm:$0xf]
  %v947 = vld [vmem:[%s5 + $0x1e0] sm:$0xff]
  %v948 = vld [vmem:[%s5 + $0x1e8] sm:$0xf]
  %v949 = vld [vmem:[%s5 + $0x1ec] sm:$0xff]
  %v950 = vld [vmem:[%s5 + $0x1f4] sm:$0xf]
  %v951 = vld [vmem:[%s5 + $0x1f8] sm:$0xff]
  %v952 = vld [vmem:[%s5 + $0x200] sm:$0xf]
  %v953 = vld [vmem:[%s5 + $0x204] sm:$0xff]
  %v954 = vld [vmem:[%s5 + $0x20c] sm:$0xf]
  %v955 = vld [vmem:[%s5 + $0x210] sm:$0xff]
  %v956 = vld [vmem:[%s5 + $0x218] sm:$0xf]
  %v957 = vld [vmem:[%s5 + $0x21c] sm:$0xff]
  %v958 = vld [vmem:[%s5 + $0x224] sm:$0xf]
  %v959 = vld [vmem:[%s5 + $0x228] sm:$0xff]
  %v960 = vld [vmem:[%s5 + $0x230] sm:$0xf]
  %v961 = vld [vmem:[%s5 + $0x234] sm:$0xff]
  %v962 = vld [vmem:[%s5 + $0x23c] sm:$0xf]
  %v963 = vld [vmem:[%s6] sm:$0x7]
  %v965 = vlaneseq
  %v966 = vshrl.u32 %v965, 7
  %v967 = vsub.s32 0, %v966
  %v968 = vrot.slane %v963, %v967
  %v969 = vlaneseq
  %v970 = vshrl.u32 %v969, 7
  %v971 = vsub.s32 1, %v970
  %v972 = vrot.slane %v963, %v971
  %v973 = vlaneseq
  %v974 = vshrl.u32 %v973, 7
  %v975 = vsub.s32 2, %v974
  %v976 = vrot.slane %v963, %v975
  %v1076 = vunpack.c.l.b16 %v867
  %v1077 = vunpack.c.h.b16 %v867
  %v1078 = vunpack.c.l.b16 %v868
  %v1079 = vunpack.c.l.b16 %v869
  %v1080 = vunpack.c.h.b16 %v869
  %v1081 = vunpack.c.l.b16 %v870
  %v1082 = vunpack.c.l.b16 %v871
  %v1083 = vunpack.c.h.b16 %v871
  %v1084 = vunpack.c.l.b16 %v872
  %v1085 = vunpack.c.l.b16 %v873
  %v1086 = vunpack.c.h.b16 %v873
  %v1087 = vunpack.c.l.b16 %v874
  %v1088 = vunpack.c.l.b16 %v875
  %v1089 = vunpack.c.h.b16 %v875
  %v1090 = vunpack.c.l.b16 %v876
  %v1091 = vunpack.c.l.b16 %v877
  %v1092 = vunpack.c.h.b16 %v877
  %v1093 = vunpack.c.l.b16 %v878
  %v1094 = vunpack.c.l.b16 %v879
  %v1095 = vunpack.c.h.b16 %v879
  %v1096 = vunpack.c.l.b16 %v880
  %v1097 = vunpack.c.l.b16 %v881
  %v1098 = vunpack.c.h.b16 %v881
  %v1099 = vunpack.c.l.b16 %v882
  %v1100 = vunpack.c.l.b16 %v883
  %v1101 = vunpack.c.h.b16 %v883
  %v1102 = vunpack.c.l.b16 %v884
  %v1103 = vunpack.c.l.b16 %v885
  %v1104 = vunpack.c.h.b16 %v885
  %v1105 = vunpack.c.l.b16 %v886
  %v1106 = vunpack.c.l.b16 %v887
  %v1107 = vunpack.c.h.b16 %v887
  %v1108 = vunpack.c.l.b16 %v888
  %v1109 = vunpack.c.l.b16 %v889
  %v1110 = vunpack.c.h.b16 %v889
  %v1111 = vunpack.c.l.b16 %v890
  %v1112 = vunpack.c.l.b16 %v891
  %v1113 = vunpack.c.h.b16 %v891
  %v1114 = vunpack.c.l.b16 %v892
  %v1115 = vunpack.c.l.b16 %v893
  %v1116 = vunpack.c.h.b16 %v893
  %v1117 = vunpack.c.l.b16 %v894
  %v1118 = vunpack.c.l.b16 %v895
  %v1119 = vunpack.c.h.b16 %v895
  %v1120 = vunpack.c.l.b16 %v896
  %v1121 = vunpack.c.l.b16 %v897
  %v1122 = vunpack.c.h.b16 %v897
  %v1123 = vunpack.c.l.b16 %v898
  %v1124 = vunpack.c.l.b16 %v899
  %v1125 = vunpack.c.h.b16 %v899
  %v1126 = vunpack.c.l.b16 %v900
  %v1127 = vunpack.c.l.b16 %v901
  %v1128 = vunpack.c.h.b16 %v901
  %v1129 = vunpack.c.l.b16 %v902
  %v1130 = vunpack.c.l.b16 %v903
  %v1131 = vunpack.c.h.b16 %v903
  %v1132 = vunpack.c.l.b16 %v904
  %v1133 = vunpack.c.l.b16 %v905
  %v1134 = vunpack.c.h.b16 %v905
  %v1135 = vunpack.c.l.b16 %v906
  %v1136 = vunpack.c.l.b16 %v907
  %v1137 = vunpack.c.h.b16 %v907
  %v1138 = vunpack.c.l.b16 %v908
  %v1139 = vunpack.c.l.b16 %v909
  %v1140 = vunpack.c.h.b16 %v909
  %v1141 = vunpack.c.l.b16 %v910
  %v1142 = vunpack.c.l.b16 %v911
  %v1143 = vunpack.c.h.b16 %v911
  %v1144 = vunpack.c.l.b16 %v912
  %v1145 = vunpack.c.l.b16 %v913
  %v1146 = vunpack.c.h.b16 %v913
  %v1147 = vunpack.c.l.b16 %v914
  %v1148 = vunpack.c.l.b16 %v915
  %v1149 = vunpack.c.h.b16 %v915
  %v1150 = vunpack.c.l.b16 %v916
  %v1151 = vunpack.c.l.b16 %v917
  %v1152 = vunpack.c.h.b16 %v917
  %v1153 = vunpack.c.l.b16 %v918
  %v1154 = vunpack.c.l.b16 %v919
  %v1155 = vunpack.c.h.b16 %v919
  %v1156 = vunpack.c.l.b16 %v920
  %v1157 = vunpack.c.l.b16 %v921
  %v1158 = vunpack.c.h.b16 %v921
  %v1159 = vunpack.c.l.b16 %v922
  %v1160 = vunpack.c.l.b16 %v923
  %v1161 = vunpack.c.h.b16 %v923
  %v1162 = vunpack.c.l.b16 %v924
  %v1163 = vunpack.c.l.b16 %v925
  %v1164 = vunpack.c.h.b16 %v925
  %v1165 = vunpack.c.l.b16 %v926
  %v1166 = vunpack.c.l.b16 %v927
  %v1167 = vunpack.c.h.b16 %v927
  %v1168 = vunpack.c.l.b16 %v928
  %v1169 = vunpack.c.l.b16 %v929
  %v1170 = vunpack.c.h.b16 %v929
  %v1171 = vunpack.c.l.b16 %v930
  %v1172 = vunpack.c.l.b16 %v931
  %v1173 = vunpack.c.h.b16 %v931
  %v1174 = vunpack.c.l.b16 %v932
  %v1175 = vunpack.c.l.b16 %v933
  %v1176 = vunpack.c.h.b16 %v933
  %v1177 = vunpack.c.l.b16 %v934
  %v1178 = vunpack.c.l.b16 %v935
  %v1179 = vunpack.c.h.b16 %v935
  %v1180 = vunpack.c.l.b16 %v936
  %v1181 = vunpack.c.l.b16 %v937
  %v1182 = vunpack.c.h.b16 %v937
  %v1183 = vunpack.c.l.b16 %v938
  %v1184 = vunpack.c.l.b16 %v939
  %v1185 = vunpack.c.h.b16 %v939
  %v1186 = vunpack.c.l.b16 %v940
  %v1187 = vunpack.c.l.b16 %v941
  %v1188 = vunpack.c.h.b16 %v941
  %v1189 = vunpack.c.l.b16 %v942
  %v1190 = vunpack.c.l.b16 %v943
  %v1191 = vunpack.c.h.b16 %v943
  %v1192 = vunpack.c.l.b16 %v944
  %v1193 = vunpack.c.l.b16 %v945
  %v1194 = vunpack.c.h.b16 %v945
  %v1195 = vunpack.c.l.b16 %v946
  %v1196 = vunpack.c.l.b16 %v947
  %v1197 = vunpack.c.h.b16 %v947
  %v1198 = vunpack.c.l.b16 %v948
  %v1199 = vunpack.c.l.b16 %v949
  %v1200 = vunpack.c.h.b16 %v949
  %v1201 = vunpack.c.l.b16 %v950
  %v1202 = vunpack.c.l.b16 %v951
  %v1203 = vunpack.c.h.b16 %v951
  %v1204 = vunpack.c.l.b16 %v952
  %v1205 = vunpack.c.l.b16 %v953
  %v1206 = vunpack.c.h.b16 %v953
  %v1207 = vunpack.c.l.b16 %v954
  %v1208 = vunpack.c.l.b16 %v955
  %v1209 = vunpack.c.h.b16 %v955
  %v1210 = vunpack.c.l.b16 %v956
  %v1211 = vunpack.c.l.b16 %v957
  %v1212 = vunpack.c.h.b16 %v957
  %v1213 = vunpack.c.l.b16 %v958
  %v1214 = vunpack.c.l.b16 %v959
  %v1215 = vunpack.c.h.b16 %v959
  %v1216 = vunpack.c.l.b16 %v960
  %v1217 = vunpack.c.l.b16 %v961
  %v1218 = vunpack.c.h.b16 %v961
  %v1219 = vunpack.c.l.b16 %v962
  %v1220 = vpack.c.b16 %v1079, %v1076
  %v1221 = vpack.c.b16 %v1080, %v1077
  %v1222 = vpack.c.b16 %v1081, %v1078
  %v1223 = vpack.c.b16 %v1085, %v1082
  %v1224 = vpack.c.b16 %v1086, %v1083
  %v1225 = vpack.c.b16 %v1087, %v1084
  %v1226 = vpack.c.b16 %v1091, %v1088
  %v1227 = vpack.c.b16 %v1092, %v1089
  %v1228 = vpack.c.b16 %v1093, %v1090
  %v1229 = vpack.c.b16 %v1097, %v1094
  %v1230 = vpack.c.b16 %v1098, %v1095
  %v1231 = vpack.c.b16 %v1099, %v1096
  %v1232 = vpack.c.b16 %v1103, %v1100
  %v1233 = vpack.c.b16 %v1104, %v1101
  %v1234 = vpack.c.b16 %v1105, %v1102
  %v1235 = vpack.c.b16 %v1109, %v1106
  %v1236 = vpack.c.b16 %v1110, %v1107
  %v1237 = vpack.c.b16 %v1111, %v1108
  %v1238 = vpack.c.b16 %v1115, %v1112
  %v1239 = vpack.c.b16 %v1116, %v1113
  %v1240 = vpack.c.b16 %v1117, %v1114
  %v1241 = vpack.c.b16 %v1121, %v1118
  %v1242 = vpack.c.b16 %v1122, %v1119
  %v1243 = vpack.c.b16 %v1123, %v1120
  %v1244 = vpack.c.b16 %v1127, %v1124
  %v1245 = vpack.c.b16 %v1128, %v1125
  %v1246 = vpack.c.b16 %v1129, %v1126
  %v1247 = vpack.c.b16 %v1133, %v1130
  %v1248 = vpack.c.b16 %v1134, %v1131
  %v1249 = vpack.c.b16 %v1135, %v1132
  %v1250 = vpack.c.b16 %v1139, %v1136
  %v1251 = vpack.c.b16 %v1140, %v1137
  %v1252 = vpack.c.b16 %v1141, %v1138
  %v1253 = vpack.c.b16 %v1145, %v1142
  %v1254 = vpack.c.b16 %v1146, %v1143
  %v1255 = vpack.c.b16 %v1147, %v1144
  %v1256 = vpack.c.b16 %v1151, %v1148
  %v1257 = vpack.c.b16 %v1152, %v1149
  %v1258 = vpack.c.b16 %v1153, %v1150
  %v1259 = vpack.c.b16 %v1157, %v1154
  %v1260 = vpack.c.b16 %v1158, %v1155
  %v1261 = vpack.c.b16 %v1159, %v1156
  %v1262 = vpack.c.b16 %v1163, %v1160
  %v1263 = vpack.c.b16 %v1164, %v1161
  %v1264 = vpack.c.b16 %v1165, %v1162
  %v1265 = vpack.c.b16 %v1169, %v1166
  %v1266 = vpack.c.b16 %v1170, %v1167
  %v1267 = vpack.c.b16 %v1171, %v1168
  %v1268 = vpack.c.b16 %v1175, %v1172
  %v1269 = vpack.c.b16 %v1176, %v1173
  %v1270 = vpack.c.b16 %v1177, %v1174
  %v1271 = vpack.c.b16 %v1181, %v1178
  %v1272 = vpack.c.b16 %v1182, %v1179
  %v1273 = vpack.c.b16 %v1183, %v1180
  %v1274 = vpack.c.b16 %v1187, %v1184
  %v1275 = vpack.c.b16 %v1188, %v1185
  %v1276 = vpack.c.b16 %v1189, %v1186
  %v1277 = vpack.c.b16 %v1193, %v1190
  %v1278 = vpack.c.b16 %v1194, %v1191
  %v1279 = vpack.c.b16 %v1195, %v1192
  %v1280 = vpack.c.b16 %v1199, %v1196
  %v1281 = vpack.c.b16 %v1200, %v1197
  %v1282 = vpack.c.b16 %v1201, %v1198
  %v1283 = vpack.c.b16 %v1205, %v1202
  %v1284 = vpack.c.b16 %v1206, %v1203
  %v1285 = vpack.c.b16 %v1207, %v1204
  %v1286 = vpack.c.b16 %v1211, %v1208
  %v1287 = vpack.c.b16 %v1212, %v1209
  %v1288 = vpack.c.b16 %v1213, %v1210
  %v1289 = vpack.c.b16 %v1217, %v1214
  %v1290 = vpack.c.b16 %v1218, %v1215
  %v1291 = vpack.c.b16 %v1219, %v1216
  %1364 = vmatprep.subr.bf16.mxu0 %v1221
  %1365 = vmatpush1.bf16.msra.mxu0 %v1220
  %1366 = vmatprep.subr.bf16.mxu0 %v1224
  %1367 = vmatpush1.bf16.msra.mxu0 %v1223
  %1368 = vmatprep.subr.bf16.mxu0 %v1227
  %1369 = vmatpush1.bf16.msra.mxu0 %v1226
  %1370 = vmatprep.subr.bf16.mxu0 %v1230
  %1371 = vmatpush1.bf16.msra.mxu0 %v1229
  %1372 = vmatprep.subr.bf16.mxu0 %v1233
  %1373 = vmatpush1.bf16.msra.mxu0 %v1232
  %1374 = vmatprep.subr.bf16.mxu0 %v1236
  %1375 = vmatpush1.bf16.msra.mxu0 %v1235
  %1376 = vmatprep.subr.bf16.mxu0 %v1239
  %1377 = vmatpush1.bf16.msra.mxu0 %v1238
  %1378 = vmatprep.subr.bf16.mxu0 %v1242
  %1379 = vmatpush1.bf16.msra.mxu0 %v1241
  %1380 = vmatprep.subr.bf16.mxu0 %v1245
  %1381 = vmatpush1.bf16.msra.mxu0 %v1244
  %1382 = vmatprep.subr.bf16.mxu0 %v1248
  %1383 = vmatpush1.bf16.msra.mxu0 %v1247
  %1384 = vmatprep.subr.bf16.mxu0 %v1251
  %1385 = vmatpush1.bf16.msra.mxu0 %v1250
  %1386 = vmatprep.subr.bf16.mxu0 %v1254
  %1387 = vmatpush1.bf16.msra.mxu0 %v1253
  %1388 = vmatprep.subr.bf16.mxu0 %v1257
  %1389 = vmatpush1.bf16.msra.mxu0 %v1256
  %1390 = vmatprep.subr.bf16.mxu0 %v1260
  %1391 = vmatpush1.bf16.msra.mxu0 %v1259
  %1392 = vmatprep.subr.bf16.mxu0 %v1263
  %1393 = vmatpush1.bf16.msra.mxu0 %v1262
  %1394 = vmatprep.subr.bf16.mxu0 %v1266
  %1395 = vmatpush1.bf16.msra.mxu0 %v1265
  %1396 = vmatprep.mubr.bf16.mxu0 %v865
  %1397 = vmatmul.mubr.bf16.gmra.mrb[0].mxu0 %v864
  %v1398 = vpop.f32.mrb[0].mxu0
  %v1399 = vadd.f32 %v968, %v1398
  %v1400 = vpop.f32.mrb[0].mxu0
  %v1401 = vadd.f32 %v972, %v1400
  %v1402 = vpop.f32.mrb[0].mxu0
  %v1403 = vpop.f32.mrb[0].mxu0
  %1404 = vdwg.mxu0
  %1405 = vmatprep.subr.bf16.mxu0 %v1269
  %1406 = vmatpush1.bf16.msra.mxu0 %v1268
  %1407 = vmatprep.subr.bf16.mxu0 %v1272
  %1408 = vmatpush1.bf16.msra.mxu0 %v1271
  %1409 = vmatprep.subr.bf16.mxu0 %v1275
  %1410 = vmatpush1.bf16.msra.mxu0 %v1274
  %1411 = vmatprep.subr.bf16.mxu0 %v1278
  %1412 = vmatpush1.bf16.msra.mxu0 %v1277
  %1413 = vmatprep.subr.bf16.mxu0 %v1281
  %1414 = vmatpush1.bf16.msra.mxu0 %v1280
  %1415 = vmatprep.subr.bf16.mxu0 %v1284
  %1416 = vmatpush1.bf16.msra.mxu0 %v1283
  %1417 = vmatprep.subr.bf16.mxu0 %v1287
  %1418 = vmatpush1.bf16.msra.mxu0 %v1286
  %1419 = vmatprep.subr.bf16.mxu0 %v1290
  %1420 = vmatpush1.bf16.msra.mxu0 %v1289
  %1421 = vmatprep.subr.bf16.mxu0 0
  %1422 = vmatpush1.bf16.msra.mxu0 0
  %1423 = vmatprep.subr.bf16.mxu0 0
  %1424 = vmatpush1.bf16.msra.mxu0 0
  %1425 = vmatprep.subr.bf16.mxu0 0
  %1426 = vmatpush1.bf16.msra.mxu0 0
  %1427 = vmatprep.subr.bf16.mxu0 0
  %1428 = vmatpush1.bf16.msra.mxu0 0
  %1429 = vmatprep.subr.bf16.mxu0 0
  %1430 = vmatpush1.bf16.msra.mxu0 0
  %1431 = vmatprep.subr.bf16.mxu0 0
  %1432 = vmatpush1.bf16.msra.mxu0 0
  %1433 = vmatprep.subr.bf16.mxu0 0
  %1434 = vmatpush1.bf16.msra.mxu0 0
  %1435 = vmatprep.subr.bf16.mxu0 0
  %1436 = vmatpush1.bf16.msra.mxu0 0
  %1437 = vmatprep.mubr.bf16.mxu0 0
  %1438 = vmatmul.mubr.bf16.gmra.mrb[0].mxu0 %v866
  %v1439 = vpop.f32.mrb[0].mxu0
  %v1440 = vadd.f32 %v1399, %v1439
  %v1441 = vpop.f32.mrb[0].mxu0
  %v1442 = vadd.f32 %v1401, %v1441
  %v1443 = vpop.f32.mrb[0].mxu0
  %v1444 = vpop.f32.mrb[0].mxu0
  %1445 = vdwg.mxu0
  %1446 = vmatprep.subr.bf16.mxu0 0
  %1447 = vmatpush1.bf16.msra.mxu0 %v1222
  %1448 = vmatprep.subr.bf16.mxu0 0
  %1449 = vmatpush1.bf16.msra.mxu0 %v1225
  %1450 = vmatprep.subr.bf16.mxu0 0
  %1451 = vmatpush1.bf16.msra.mxu0 %v1228
  %1452 = vmatprep.subr.bf16.mxu0 0
  %1453 = vmatpush1.bf16.msra.mxu0 %v1231
  %1454 = vmatprep.subr.bf16.mxu0 0
  %1455 = vmatpush1.bf16.msra.mxu0 %v1234
  %1456 = vmatprep.subr.bf16.mxu0 0
  %1457 = vmatpush1.bf16.msra.mxu0 %v1237
  %1458 = vmatprep.subr.bf16.mxu0 0
  %1459 = vmatpush1.bf16.msra.mxu0 %v1240
  %1460 = vmatprep.subr.bf16.mxu0 0
  %1461 = vmatpush1.bf16.msra.mxu0 %v1243
  %1462 = vmatprep.subr.bf16.mxu0 0
  %1463 = vmatpush1.bf16.msra.mxu0 %v1246
  %1464 = vmatprep.subr.bf16.mxu0 0
  %1465 = vmatpush1.bf16.msra.mxu0 %v1249
  %1466 = vmatprep.subr.bf16.mxu0 0
  %1467 = vmatpush1.bf16.msra.mxu0 %v1252
  %1468 = vmatprep.subr.bf16.mxu0 0
  %1469 = vmatpush1.bf16.msra.mxu0 %v1255
  %1470 = vmatprep.subr.bf16.mxu0 0
  %1471 = vmatpush1.bf16.msra.mxu0 %v1258
  %1472 = vmatprep.subr.bf16.mxu0 0
  %1473 = vmatpush1.bf16.msra.mxu0 %v1261
  %1474 = vmatprep.subr.bf16.mxu0 0
  %1475 = vmatpush1.bf16.msra.mxu0 %v1264
  %1476 = vmatprep.subr.bf16.mxu0 0
  %1477 = vmatpush1.bf16.msra.mxu0 %v1267
  %1478 = vmatprep.mubr.bf16.mxu0 %v865
  %1479 = vmatmul.mubr.bf16.gmra.mrb[0].mxu0 %v864
  %v1480 = vpop.f32.mrb[0].mxu0
  %v1481 = vadd.f32 %v976, %v1480
  %v1482 = vpop.f32.mrb[0].mxu0
  %v1483 = vpop.f32.mrb[0].mxu0
  %v1484 = vpop.f32.mrb[0].mxu0
  %1485 = vdwg.mxu0
  %1486 = vmatprep.subr.bf16.mxu0 0
  %1487 = vmatpush1.bf16.msra.mxu0 %v1270
  %1488 = vmatprep.subr.bf16.mxu0 0
  %1489 = vmatpush1.bf16.msra.mxu0 %v1273
  %1490 = vmatprep.subr.bf16.mxu0 0
  %1491 = vmatpush1.bf16.msra.mxu0 %v1276
  %1492 = vmatprep.subr.bf16.mxu0 0
  %1493 = vmatpush1.bf16.msra.mxu0 %v1279
  %1494 = vmatprep.subr.bf16.mxu0 0
  %1495 = vmatpush1.bf16.msra.mxu0 %v1282
  %1496 = vmatprep.subr.bf16.mxu0 0
  %1497 = vmatpush1.bf16.msra.mxu0 %v1285
  %1498 = vmatprep.subr.bf16.mxu0 0
  %1499 = vmatpush1.bf16.msra.mxu0 %v1288
  %1500 = vmatprep.subr.bf16.mxu0 0
  %1501 = vmatpush1.bf16.msra.mxu0 %v1291
  %1502 = vmatprep.subr.bf16.mxu0 0
  %1503 = vmatpush1.bf16.msra.mxu0 0
  %1504 = vmatprep.subr.bf16.mxu0 0
  %1505 = vmatpush1.bf16.msra.mxu0 0
  %1506 = vmatprep.subr.bf16.mxu0 0
  %1507 = vmatpush1.bf16.msra.mxu0 0
  %1508 = vmatprep.subr.bf16.mxu0 0
  %1509 = vmatpush1.bf16.msra.mxu0 0
  %1510 = vmatprep.subr.bf16.mxu0 0
  %1511 = vmatpush1.bf16.msra.mxu0 0
  %1512 = vmatprep.subr.bf16.mxu0 0
  %1513 = vmatpush1.bf16.msra.mxu0 0
  %1514 = vmatprep.subr.bf16.mxu0 0
  %1515 = vmatpush1.bf16.msra.mxu0 0
  %1516 = vmatprep.subr.bf16.mxu0 0
  %1517 = vmatpush1.bf16.msra.mxu0 0
  %1518 = vmatprep.mubr.bf16.mxu0 0
  %1519 = vmatmul.mubr.bf16.gmra.mrb[0].mxu0 %v866
  %v1520 = vpop.f32.mrb[0].mxu0
  %v1521 = vadd.f32 %v1481, %v1520
  %v1522 = vpop.f32.mrb[0].mxu0
  %v1523 = vpop.f32.mrb[0].mxu0
  %v1524 = vpop.f32.mrb[0].mxu0
  %1525 = vdwg.mxu0
  %v1526 = vmax.f32 %v1440, 0.0
  %v1527 = vmax.f32 %v1442, 0.0
  %v1528 = vmax.f32 %v1521, 0.0
  %v1529 = vpack.c.bf16 %v1526, %v1526
  %v1530 = vpack.c.bf16 %v1527, %v1527
  %v1531 = vpack.c.bf16 %v1528, %v1528
  %v1532 = vld [vmem:[%s7] sm:$0xf]
  %v1533 = vld [vmem:[%s7 + $0x4] sm:$0xf]
  %v1534 = vld [vmem:[%s7 + $0x8] sm:$0xf]
  %v1535 = vld [vmem:[%s7 + $0xc] sm:$0xf]
  %v1536 = vld [vmem:[%s7 + $0x10] sm:$0xf]
  %v1537 = vld [vmem:[%s7 + $0x14] sm:$0xf]
  %v1538 = vld [vmem:[%s7 + $0x18] sm:$0xf]
  %v1539 = vld [vmem:[%s7 + $0x1c] sm:$0xf]
  %v1540 = vld [vmem:[%s7 + $0x20] sm:$0xf]
  %v1541 = vld [vmem:[%s7 + $0x24] sm:$0xf]
  %v1542 = vld [vmem:[%s7 + $0x28] sm:$0xf]
  %v1543 = vld [vmem:[%s7 + $0x2c] sm:$0xf]
  %v1544 = vld [vmem:[%s7 + $0x30] sm:$0xf]
  %v1545 = vld [vmem:[%s7 + $0x34] sm:$0xf]
  %v1546 = vld [vmem:[%s7 + $0x38] sm:$0xf]
  %v1547 = vld [vmem:[%s7 + $0x3c] sm:$0xf]
  %v1548 = vld [vmem:[%s7 + $0x40] sm:$0xf]
  %v1549 = vld [vmem:[%s7 + $0x44] sm:$0xf]
  %v1550 = vld [vmem:[%s7 + $0x48] sm:$0xf]
  %v1551 = vld [vmem:[%s7 + $0x4c] sm:$0xf]
  %v1552 = vld [vmem:[%s7 + $0x50] sm:$0xf]
  %v1553 = vld [vmem:[%s7 + $0x54] sm:$0xf]
  %v1554 = vld [vmem:[%s7 + $0x58] sm:$0xf]
  %v1555 = vld [vmem:[%s7 + $0x5c] sm:$0xf]
  %v1556 = vld [vmem:[%s7 + $0x60] sm:$0xf]
  %v1557 = vld [vmem:[%s7 + $0x64] sm:$0xf]
  %v1558 = vld [vmem:[%s7 + $0x68] sm:$0xf]
  %v1559 = vld [vmem:[%s7 + $0x6c] sm:$0xf]
  %v1560 = vld [vmem:[%s7 + $0x70] sm:$0xf]
  %v1561 = vld [vmem:[%s7 + $0x74] sm:$0xf]
  %v1562 = vld [vmem:[%s7 + $0x78] sm:$0xf]
  %v1563 = vld [vmem:[%s7 + $0x7c] sm:$0xf]
  %v1564 = vld [vmem:[%s7 + $0x80] sm:$0xf]
  %v1565 = vld [vmem:[%s7 + $0x84] sm:$0xf]
  %v1566 = vld [vmem:[%s7 + $0x88] sm:$0xf]
  %v1567 = vld [vmem:[%s7 + $0x8c] sm:$0xf]
  %v1568 = vld [vmem:[%s7 + $0x90] sm:$0xf]
  %v1569 = vld [vmem:[%s7 + $0x94] sm:$0xf]
  %v1570 = vld [vmem:[%s7 + $0x98] sm:$0xf]
  %v1571 = vld [vmem:[%s7 + $0x9c] sm:$0xf]
  %v1572 = vld [vmem:[%s7 + $0xa0] sm:$0xf]
  %v1573 = vld [vmem:[%s7 + $0xa4] sm:$0xf]
  %v1574 = vld [vmem:[%s7 + $0xa8] sm:$0xf]
  %v1575 = vld [vmem:[%s7 + $0xac] sm:$0xf]
  %v1576 = vld [vmem:[%s7 + $0xb0] sm:$0xf]
  %v1577 = vld [vmem:[%s7 + $0xb4] sm:$0xf]
  %v1578 = vld [vmem:[%s7 + $0xb8] sm:$0xf]
  %v1579 = vld [vmem:[%s7 + $0xbc] sm:$0xf]
  %v1580 = vld [vmem:[%s8] sm:$0x1]
  %v1582 = vlaneseq
  %v1583 = vshrl.u32 %v1582, 7
  %v1584 = vsub.s32 0, %v1583
  %v1585 = vrot.slane %v1580, %v1584
  %v1635 = vunpack.c.l.b16 %v1532
  %v1636 = vunpack.c.l.b16 %v1533
  %v1637 = vunpack.c.l.b16 %v1534
  %v1638 = vunpack.c.l.b16 %v1535
  %v1639 = vunpack.c.l.b16 %v1536
  %v1640 = vunpack.c.l.b16 %v1537
  %v1641 = vunpack.c.l.b16 %v1538
  %v1642 = vunpack.c.l.b16 %v1539
  %v1643 = vunpack.c.l.b16 %v1540
  %v1644 = vunpack.c.l.b16 %v1541
  %v1645 = vunpack.c.l.b16 %v1542
  %v1646 = vunpack.c.l.b16 %v1543
  %v1647 = vunpack.c.l.b16 %v1544
  %v1648 = vunpack.c.l.b16 %v1545
  %v1649 = vunpack.c.l.b16 %v1546
  %v1650 = vunpack.c.l.b16 %v1547
  %v1651 = vunpack.c.l.b16 %v1548
  %v1652 = vunpack.c.l.b16 %v1549
  %v1653 = vunpack.c.l.b16 %v1550
  %v1654 = vunpack.c.l.b16 %v1551
  %v1655 = vunpack.c.l.b16 %v1552
  %v1656 = vunpack.c.l.b16 %v1553
  %v1657 = vunpack.c.l.b16 %v1554
  %v1658 = vunpack.c.l.b16 %v1555
  %v1659 = vunpack.c.l.b16 %v1556
  %v1660 = vunpack.c.l.b16 %v1557
  %v1661 = vunpack.c.l.b16 %v1558
  %v1662 = vunpack.c.l.b16 %v1559
  %v1663 = vunpack.c.l.b16 %v1560
  %v1664 = vunpack.c.l.b16 %v1561
  %v1665 = vunpack.c.l.b16 %v1562
  %v1666 = vunpack.c.l.b16 %v1563
  %v1667 = vunpack.c.l.b16 %v1564
  %v1668 = vunpack.c.l.b16 %v1565
  %v1669 = vunpack.c.l.b16 %v1566
  %v1670 = vunpack.c.l.b16 %v1567
  %v1671 = vunpack.c.l.b16 %v1568
  %v1672 = vunpack.c.l.b16 %v1569
  %v1673 = vunpack.c.l.b16 %v1570
  %v1674 = vunpack.c.l.b16 %v1571
  %v1675 = vunpack.c.l.b16 %v1572
  %v1676 = vunpack.c.l.b16 %v1573
  %v1677 = vunpack.c.l.b16 %v1574
  %v1678 = vunpack.c.l.b16 %v1575
  %v1679 = vunpack.c.l.b16 %v1576
  %v1680 = vunpack.c.l.b16 %v1577
  %v1681 = vunpack.c.l.b16 %v1578
  %v1682 = vunpack.c.l.b16 %v1579
  %v1683 = vpack.c.b16 %v1636, %v1635
  %v1684 = vpack.c.b16 %v1638, %v1637
  %v1685 = vpack.c.b16 %v1640, %v1639
  %v1686 = vpack.c.b16 %v1642, %v1641
  %v1687 = vpack.c.b16 %v1644, %v1643
  %v1688 = vpack.c.b16 %v1646, %v1645
  %v1689 = vpack.c.b16 %v1648, %v1647
  %v1690 = vpack.c.b16 %v1650, %v1649
  %v1691 = vpack.c.b16 %v1652, %v1651
  %v1692 = vpack.c.b16 %v1654, %v1653
  %v1693 = vpack.c.b16 %v1656, %v1655
  %v1694 = vpack.c.b16 %v1658, %v1657
  %v1695 = vpack.c.b16 %v1660, %v1659
  %v1696 = vpack.c.b16 %v1662, %v1661
  %v1697 = vpack.c.b16 %v1664, %v1663
  %v1698 = vpack.c.b16 %v1666, %v1665
  %v1699 = vpack.c.b16 %v1668, %v1667
  %v1700 = vpack.c.b16 %v1670, %v1669
  %v1701 = vpack.c.b16 %v1672, %v1671
  %v1702 = vpack.c.b16 %v1674, %v1673
  %v1703 = vpack.c.b16 %v1676, %v1675
  %v1704 = vpack.c.b16 %v1678, %v1677
  %v1705 = vpack.c.b16 %v1680, %v1679
  %v1706 = vpack.c.b16 %v1682, %v1681
  %1731 = vmatprep.subr.bf16.mxu0 0
  %1732 = vmatpush1.bf16.msra.mxu0 %v1683
  %1733 = vmatprep.subr.bf16.mxu0 0
  %1734 = vmatpush1.bf16.msra.mxu0 %v1684
  %1735 = vmatprep.subr.bf16.mxu0 0
  %1736 = vmatpush1.bf16.msra.mxu0 %v1685
  %1737 = vmatprep.subr.bf16.mxu0 0
  %1738 = vmatpush1.bf16.msra.mxu0 %v1686
  %1739 = vmatprep.subr.bf16.mxu0 0
  %1740 = vmatpush1.bf16.msra.mxu0 %v1687
  %1741 = vmatprep.subr.bf16.mxu0 0
  %1742 = vmatpush1.bf16.msra.mxu0 %v1688
  %1743 = vmatprep.subr.bf16.mxu0 0
  %1744 = vmatpush1.bf16.msra.mxu0 %v1689
  %1745 = vmatprep.subr.bf16.mxu0 0
  %1746 = vmatpush1.bf16.msra.mxu0 %v1690
  %1747 = vmatprep.subr.bf16.mxu0 0
  %1748 = vmatpush1.bf16.msra.mxu0 %v1691
  %1749 = vmatprep.subr.bf16.mxu0 0
  %1750 = vmatpush1.bf16.msra.mxu0 %v1692
  %1751 = vmatprep.subr.bf16.mxu0 0
  %1752 = vmatpush1.bf16.msra.mxu0 %v1693
  %1753 = vmatprep.subr.bf16.mxu0 0
  %1754 = vmatpush1.bf16.msra.mxu0 %v1694
  %1755 = vmatprep.subr.bf16.mxu0 0
  %1756 = vmatpush1.bf16.msra.mxu0 %v1695
  %1757 = vmatprep.subr.bf16.mxu0 0
  %1758 = vmatpush1.bf16.msra.mxu0 %v1696
  %1759 = vmatprep.subr.bf16.mxu0 0
  %1760 = vmatpush1.bf16.msra.mxu0 %v1697
  %1761 = vmatprep.subr.bf16.mxu0 0
  %1762 = vmatpush1.bf16.msra.mxu0 %v1698
  %1763 = vmatprep.mubr.bf16.mxu0 %v1530
  %1764 = vmatmul.mubr.bf16.gmra.mrb[0].mxu0 %v1529
  %v1765 = vpop.f32.mrb[0].mxu0
  %v1766 = vadd.f32 %v1585, %v1765
  %v1767 = vpop.f32.mrb[0].mxu0
  %v1768 = vpop.f32.mrb[0].mxu0
  %v1769 = vpop.f32.mrb[0].mxu0
  %1770 = vdwg.mxu0
  %1771 = vmatprep.subr.bf16.mxu0 0
  %1772 = vmatpush1.bf16.msra.mxu0 %v1699
  %1773 = vmatprep.subr.bf16.mxu0 0
  %1774 = vmatpush1.bf16.msra.mxu0 %v1700
  %1775 = vmatprep.subr.bf16.mxu0 0
  %1776 = vmatpush1.bf16.msra.mxu0 %v1701
  %1777 = vmatprep.subr.bf16.mxu0 0
  %1778 = vmatpush1.bf16.msra.mxu0 %v1702
  %1779 = vmatprep.subr.bf16.mxu0 0
  %1780 = vmatpush1.bf16.msra.mxu0 %v1703
  %1781 = vmatprep.subr.bf16.mxu0 0
  %1782 = vmatpush1.bf16.msra.mxu0 %v1704
  %1783 = vmatprep.subr.bf16.mxu0 0
  %1784 = vmatpush1.bf16.msra.mxu0 %v1705
  %1785 = vmatprep.subr.bf16.mxu0 0
  %1786 = vmatpush1.bf16.msra.mxu0 %v1706
  %1787 = vmatprep.subr.bf16.mxu0 0
  %1788 = vmatpush1.bf16.msra.mxu0 0
  %1789 = vmatprep.subr.bf16.mxu0 0
  %1790 = vmatpush1.bf16.msra.mxu0 0
  %1791 = vmatprep.subr.bf16.mxu0 0
  %1792 = vmatpush1.bf16.msra.mxu0 0
  %1793 = vmatprep.subr.bf16.mxu0 0
  %1794 = vmatpush1.bf16.msra.mxu0 0
  %1795 = vmatprep.subr.bf16.mxu0 0
  %1796 = vmatpush1.bf16.msra.mxu0 0
  %1797 = vmatprep.subr.bf16.mxu0 0
  %1798 = vmatpush1.bf16.msra.mxu0 0
  %1799 = vmatprep.subr.bf16.mxu0 0
  %1800 = vmatpush1.bf16.msra.mxu0 0
  %1801 = vmatprep.subr.bf16.mxu0 0
  %1802 = vmatpush1.bf16.msra.mxu0 0
  %1803 = vmatprep.mubr.bf16.mxu0 0
  %1804 = vmatmul.mubr.bf16.gmra.mrb[0].mxu0 %v1531
  %v1805 = vpop.f32.mrb[0].mxu0
  %v1806 = vadd.f32 %v1766, %v1805
  %v1807 = vpop.f32.mrb[0].mxu0
  %v1808 = vpop.f32.mrb[0].mxu0
  %v1809 = vpop.f32.mrb[0].mxu0
  %1810 = vdwg.mxu0
  %v1811 = vxor.u32 %v1806, 2147483648
  %v1812 = vmul.f32 %v1811, 1.442695
  %v1813 = vpow.pop %v1812
  %v1814 = vadd.f32 %v1813, 1.0
  %v1815 = vrcp.pop %v1814
  %v1816 = vmul.f32 1.0, %v1815
  %vm1817 = vcmask 64512
  %1818 = vst.msk [vmem:[%s9] sm:$0xff] %vm1817, %v1816
  // Predicated region
  $region38: #{outer_pnn_forward.1} parent=0 // pred_check
    _
  $region39: #{outer_pnn_forward.1} parent=0 // pred_check_branch
    %1820 = sbr.rel (0) target = $region41
  $region40: #{outer_pnn_forward.1} parent=0 // pred_region
    _
  $region41: #{outer_pnn_forward.1} parent=0 // pred_fallthru
    _
  // Predicated region
  $region42: #{outer_pnn_forward.1} parent=0 // pred_check
    _
  $region43: #{outer_pnn_forward.1} parent=0 // pred_check_branch
    %1822 = sbr.rel (0) target = $region45
  $region44: #{outer_pnn_forward.1} parent=0 // pred_region
    _
  $region45: #{outer_pnn_forward.1} parent=0 // pred_fallthru
    _

</llo_original>
